<compile_context>
chip_gen: v7x
topology: tpu7x:2x2x1
jax: 0.10.0
libtpu: 0.0.40
codegen_flags: <defaults>
</compile_context>

<pallas_src>
import functools

import jax
import jax.numpy as jnp
from jax.experimental import pallas as pl
from jax.experimental.pallas import tpu as pltpu

# ----------------------------- config -----------------------------------
N_NODES = 64          # number of graph nodes
IN_DIM = 16           # data_feature['input_dim']
NUM_HIDDEN = 32       # config['nhid']
MASK_RATE = 0.5       # config['mask_rate']
ALPHA_L = 3           # config['alpha_l']
NUM_EDGES = 256

H = NUM_HIDDEN        # uniform in-kernel feature width (IN_DIM is zero-padded to H)
N_WMATS = 6           # enc0.w1, enc0.w2, enc1.w1, enc1.w2, dec.w_comb, dec.w2
V_ROWS = 24           # 17 used vector rows, padded to a multiple of 8

# row indices in the f32 vector slab
_ROW_TOKEN = 0        # enc_mask_token
# enc0: b1,g1,be1,b2,g2,be2 -> rows 1..6 ; enc1 -> rows 7..12
# dec0: b1,g1,be1 -> rows 13..15 ; b2 -> row 16

VMEM_SPEC = pl.BlockSpec(memory_space=pltpu.MemorySpace.VMEM)


# --------------------------- kernel helpers ------------------------------
def _layernorm(h, gamma, beta, eps=1e-5):
    # torch.nn.LayerNorm: biased variance, eps=1e-5 (kept in f32)
    mu = jnp.mean(h, axis=-1, keepdims=True)
    diff = h - mu
    var = jnp.mean(diff * diff, axis=-1, keepdims=True)
    return diff * jax.lax.rsqrt(var + eps) * gamma + beta


def _mxu_dot(a, b):
    # bf16 inputs to the MXU, f32 accumulation (astype is a no-op if already bf16).
    return jnp.dot(a.astype(jnp.bfloat16), b.astype(jnp.bfloat16),
                   preferred_element_type=jnp.float32)


def _gin_layer(hin, a_hat, w1, b1, g1, be1, w2, b2, g2=None, be2=None,
               final_norm_act=False):
    """GINConv(eps=0) + 2-layer MLP (+ optional LayerNorm+ReLU ApplyNodeFunc head)."""
    agg = _mxu_dot(a_hat, hin)                     # (A + I) @ h  == h + A @ h
    z = _mxu_dot(agg, w1) + b1
    z = _layernorm(z, g1, be1)
    z = jnp.maximum(z, 0.0)
    o = _mxu_dot(z, w2) + b2
    if final_norm_act:                             # ApplyNodeFunc head
        o = _layernorm(o, g2, be2)
        o = jnp.maximum(o, 0.0)
    return o


# ----------------------------- fused kernel ------------------------------
def graphmae_fused_kernel(x_ref, a_ref, mask_ref, w_ref, v_ref, loss_ref,
                          *, alpha: int, inv_num_mask: float):
    x = x_ref[...]                 # (N, H) f32, cols >= IN_DIM are zero
    a_hat = a_ref[...]             # (N, N) bf16 = A + I  (cast once in the wrapper)
    mask = mask_ref[...]           # (N, 1) f32: 1.0 on masked nodes
    keep = 1.0 - mask
    W = w_ref[...]                 # (6H, H) bf16 packed weight slab
    V = v_ref[...]                 # (V_ROWS, H) f32 packed vector slab

    def wm(i):                     # static slice -> i-th (H, H) weight matrix
        return W[i * H:(i + 1) * H, :]

    def vr(i):                     # static slice -> i-th (1, H) vector row
        return V[i:i + 1, :]

    # 1) encoding_mask_noise (replace_rate = 0): masked rows <- enc_mask_token
    use_x = x * keep + vr(_ROW_TOKEN) * mask

    # 2) encoder: 2x GIN layers, each with a LayerNorm+ReLU ApplyNodeFunc head
    h = _gin_layer(use_x, a_hat, wm(0), vr(1), vr(2), vr(3),
                   wm(1), vr(4), vr(5), vr(6), final_norm_act=True)
    h = _gin_layer(h, a_hat, wm(2), vr(7), vr(8), vr(9),
                   wm(3), vr(10), vr(11), vr(12), final_norm_act=True)

    # 3+4) encoder_to_decoder + re-mask + decoder GIN layer.
    #      (h @ W_e2d) * keep == (h * keep) @ W_e2d and W_e2d is folded into the
    #      decoder's first MLP weight in the wrapper: wm(4) = W_e2d @ dec_w1.
    recon = _gin_layer(h * keep, a_hat, wm(4), vr(13), vr(14), vr(15),
                       wm(5), vr(16), final_norm_act=False)

    # 5) sce loss on masked rows: F.normalize(p=2, eps=1e-12) -> cosine -> (1-c)^alpha
    #    (padded cols are exactly zero in both recon and x, so width-H norms/dots
    #     equal the width-IN_DIM ones)
    inv_nr = jax.lax.rsqrt(jnp.maximum(jnp.sum(recon * recon, axis=-1, keepdims=True), 1e-24))
    inv_ni = jax.lax.rsqrt(jnp.maximum(jnp.sum(x * x, axis=-1, keepdims=True), 1e-24))
    cos = jnp.sum(recon * x, axis=-1, keepdims=True) * inv_nr * inv_ni   # (N, 1)
    d = 1.0 - cos
    per_row = d
    for _ in range(alpha - 1):      # integer power as VPU multiplies (no EUP pow)
        per_row = per_row * d
    # masked-row mean == (sum over masked rows) / num_mask
    loss_ref[...] = jnp.sum(per_row * mask, axis=0, keepdims=True) * inv_num_mask


# ------------------------------ wrapper ----------------------------------
def graphmae_forward(packed, x, a_hat_bf16, mask_key):
    n = x.shape[0]
    num_mask = int(MASK_RATE * n)
    assert num_mask >= 1, "mask_rate * num_nodes must be >= 1"

    # mask construction (randperm) stays host/XLA-side; apply happens in-kernel.
    perm = jax.random.permutation(mask_key, n)
    is_masked = jnp.zeros((n,), jnp.bool_).at[perm[:num_mask]].set(True)
    mask_col = is_masked.astype(jnp.float32)[:, None]               # (N, 1)

    # zero-pad features to the uniform in-kernel width H (lane-dense layout)
    x_pad = jnp.zeros((n, H), jnp.float32).at[:, :IN_DIM].set(x)

    kernel = functools.partial(graphmae_fused_kernel,
                               alpha=ALPHA_L,
                               inv_num_mask=1.0 / float(num_mask))

    # advisory cost hint so XLA overlaps this tiny custom call with surrounding ops
    flops = 3 * 2 * n * n * H + 6 * 2 * n * H * H
    bytes_accessed = (x_pad.size * 4 + a_hat_bf16.size * 2 + mask_col.size * 4
                      + packed["w_slab"].size * 2 + packed["v_slab"].size * 4 + 4)
    cost = pl.CostEstimate(flops=flops, transcendentals=7 * n,
                           bytes_accessed=bytes_accessed)

    operands = (x_pad, a_hat_bf16, mask_col, packed["w_slab"], packed["v_slab"])
    loss = pl.pallas_call(
        kernel,
        out_shape=jax.ShapeDtypeStruct((1, 1), jnp.float32),
        in_specs=[VMEM_SPEC] * len(operands),
        out_specs=VMEM_SPEC,
        cost_estimate=cost,
    )(*operands)
    return loss[0, 0]


# --------------------------- parameter init -------------------------------
def _mlp_layer_params(key, d_in, d_hid, d_out, head_norm):
    ks = jax.random.split(key, 4)
    p = {
        "w1": 0.1 * jax.random.normal(ks[0], (d_in, d_hid), jnp.float32),
        "b1": 0.1 * jax.random.normal(ks[1], (d_hid,), jnp.float32),
        "g1": jnp.ones((d_hid,), jnp.float32),
        "be1": jnp.zeros((d_hid,), jnp.float32),
        "w2": 0.1 * jax.random.normal(ks[2], (d_hid, d_out), jnp.float32),
        "b2": 0.1 * jax.random.normal(ks[3], (d_out,), jnp.float32),
    }
    if head_norm:                      # ApplyNodeFunc LayerNorm params
        p["g2"] = jnp.ones((d_out,), jnp.float32)
        p["be2"] = jnp.zeros((d_out,), jnp.float32)
    return p


def init_params(key):
    ks = jax.random.split(key, 5)
    return {
        # encoder GIN: layer0 (F -> H -> H), layer1 (H -> H -> H), both ApplyNodeFunc
        "enc0": _mlp_layer_params(ks[0], IN_DIM, NUM_HIDDEN, NUM_HIDDEN, True),
        "enc1": _mlp_layer_params(ks[1], NUM_HIDDEN, NUM_HIDDEN, NUM_HIDDEN, True),
        # decoder GIN: single layer (H -> H -> F), plain MLP head (no final norm/act)
        "dec0": _mlp_layer_params(ks[2], NUM_HIDDEN, NUM_HIDDEN, IN_DIM, False),
        # encoder_to_decoder: Linear(H, H, bias=False), stored as (in, out)
        "w_e2d": 0.1 * jax.random.normal(ks[3], (NUM_HIDDEN, NUM_HIDDEN), jnp.float32),
        # enc_mask_token: nn.Parameter(torch.zeros(1, in_dim)) -- randomized here
        # so the masking path is exercised non-trivially
        "enc_mask_token": 0.1 * jax.random.normal(ks[4], (1, IN_DIM), jnp.float32),
    }


def pack_params(params):
    """Pack all parameters into one bf16 weight slab + one f32 vector slab."""
    e0, e1, d0 = params["enc0"], params["enc1"], params["dec0"]

    # fold the bias-free encoder_to_decoder linear into the decoder's first weight
    w_comb = params["w_e2d"] @ d0["w1"]                              # (H, H)
    # enc0.w1 is (IN_DIM, H): pad input rows (padded feature cols are exactly zero)
    w_e0_1 = jnp.zeros((H, H), jnp.float32).at[:IN_DIM, :].set(e0["w1"])
    # dec.w2 is (H, IN_DIM): pad output cols with zeros
    w_d0_2 = jnp.zeros((H, H), jnp.float32).at[:, :IN_DIM].set(d0["w2"])
    w_slab = jnp.concatenate(
        [w_e0_1, e0["w2"], e1["w1"], e1["w2"], w_comb, w_d0_2], axis=0
    ).astype(jnp.bfloat16)                                           # (6H, H) bf16

    def row(v):
        r = jnp.zeros((H,), jnp.float32)
        v = v.reshape(-1)
        return r.at[:v.shape[0]].set(v)

    rows = [row(params["enc_mask_token"])]                           # row 0
    for layer, has_head in ((e0, True), (e1, True), (d0, False)):
        rows += [row(layer["b1"]), row(layer["g1"]), row(layer["be1"]),
                 row(layer["b2"])]
        if has_head:
            rows += [row(layer["g2"]), row(layer["be2"])]
    v_slab = jnp.zeros((V_ROWS, H), jnp.float32).at[:len(rows), :].set(jnp.stack(rows))
    return {"w_slab": w_slab, "v_slab": v_slab}


# ------------------------------- main --------------------------------------
if __name__ == "__main__":
    root = jax.random.PRNGKey(0)
    k_param, k_x, k_src, k_dst, k_mask = jax.random.split(root, 5)

    params = init_params(k_param)
    packed = pack_params(params)

    # node features
    x = jax.random.normal(k_x, (N_NODES, IN_DIM), jnp.float32)

    # random edge_index (2, E) -> dense adjacency A[dst, src] (multi-edge counts),
    # with the GIN self-term folded in once: A_hat = A + I, cast ONCE to bf16
    # (edge multiplicities << 256 so the bf16 representation is exact).
    src = jax.random.randint(k_src, (NUM_EDGES,), 0, N_NODES)
    dst = jax.random.randint(k_dst, (NUM_EDGES,), 0, N_NODES)
    adj = jnp.zeros((N_NODES, N_NODES), jnp.float32).at[dst, src].add(1.0)
    a_hat = (adj + jnp.eye(N_NODES, dtype=jnp.float32)).astype(jnp.bfloat16)

    fwd = jax.jit(graphmae_forward)
    loss = fwd(packed, x, a_hat, k_mask)
    loss = jax.block_until_ready(loss)

    assert jnp.isfinite(loss), "loss is not finite"
    print("KERNEL_OK")
</pallas_src>

<mosaic_0001>
module attributes {stable_mosaic.version = 11 : i64} {
  func.func @graphmae_fused_kernel(%arg0: memref<64x32xf32, #tpu.memory_space<vmem>>, %arg1: memref<64x64xbf16, #tpu.memory_space<vmem>>, %arg2: memref<64x1xf32, #tpu.memory_space<vmem>>, %arg3: memref<192x32xbf16, #tpu.memory_space<vmem>>, %arg4: memref<24x32xf32, #tpu.memory_space<vmem>>, %arg5: memref<1x1xf32, #tpu.memory_space<vmem>>) attributes {dimension_semantics = [], scalar_prefetch = 0 : i64, scratch_operands = 0 : i64, tpu.core_type = #tpu.core_type<tc>} {
    %c0 = arith.constant 0 : index
    %c0_0 = arith.constant 0 : index
    %0 = vector.load %arg0[%c0, %c0_0] : memref<64x32xf32, #tpu.memory_space<vmem>>, vector<64x32xf32>
    %c0_1 = arith.constant 0 : index
    %c0_2 = arith.constant 0 : index
    %1 = vector.load %arg1[%c0_1, %c0_2] : memref<64x64xbf16, #tpu.memory_space<vmem>>, vector<64x64xbf16>
    %c0_3 = arith.constant 0 : index
    %c0_4 = arith.constant 0 : index
    %2 = vector.load %arg2[%c0_3, %c0_4] : memref<64x1xf32, #tpu.memory_space<vmem>>, vector<64x1xf32>
    %cst = arith.constant 1.000000e+00 : f32
    %3 = vector.broadcast %cst : f32 to vector<64x1xf32>
    %4 = arith.subf %3, %2 : vector<64x1xf32>
    %c0_5 = arith.constant 0 : index
    %c0_6 = arith.constant 0 : index
    %5 = vector.load %arg3[%c0_5, %c0_6] : memref<192x32xbf16, #tpu.memory_space<vmem>>, vector<192x32xbf16>
    %c0_7 = arith.constant 0 : index
    %c0_8 = arith.constant 0 : index
    %6 = vector.load %arg4[%c0_7, %c0_8] : memref<24x32xf32, #tpu.memory_space<vmem>>, vector<24x32xf32>
    %7 = vector.broadcast %4 : vector<64x1xf32> to vector<64x32xf32>
    %8 = arith.mulf %0, %7 : vector<64x32xf32>
    %9 = vector.extract_strided_slice %6 {offsets = [0, 0], sizes = [1, 32], strides = [1, 1]} : vector<24x32xf32> to vector<1x32xf32>
    %10 = vector.broadcast %9 : vector<1x32xf32> to vector<64x32xf32>
    %11 = vector.broadcast %2 : vector<64x1xf32> to vector<64x32xf32>
    %12 = arith.mulf %10, %11 : vector<64x32xf32>
    %13 = arith.addf %8, %12 : vector<64x32xf32>
    %14 = vector.extract_strided_slice %5 {offsets = [0, 0], sizes = [32, 32], strides = [1, 1]} : vector<192x32xbf16> to vector<32x32xbf16>
    %15 = vector.extract_strided_slice %6 {offsets = [1, 0], sizes = [1, 32], strides = [1, 1]} : vector<24x32xf32> to vector<1x32xf32>
    %16 = vector.extract_strided_slice %6 {offsets = [2, 0], sizes = [1, 32], strides = [1, 1]} : vector<24x32xf32> to vector<1x32xf32>
    %17 = vector.extract_strided_slice %6 {offsets = [3, 0], sizes = [1, 32], strides = [1, 1]} : vector<24x32xf32> to vector<1x32xf32>
    %18 = vector.extract_strided_slice %5 {offsets = [32, 0], sizes = [32, 32], strides = [1, 1]} : vector<192x32xbf16> to vector<32x32xbf16>
    %19 = vector.extract_strided_slice %6 {offsets = [4, 0], sizes = [1, 32], strides = [1, 1]} : vector<24x32xf32> to vector<1x32xf32>
    %20 = vector.extract_strided_slice %6 {offsets = [5, 0], sizes = [1, 32], strides = [1, 1]} : vector<24x32xf32> to vector<1x32xf32>
    %21 = vector.extract_strided_slice %6 {offsets = [6, 0], sizes = [1, 32], strides = [1, 1]} : vector<24x32xf32> to vector<1x32xf32>
    %22 = arith.truncf %13 : vector<64x32xf32> to vector<64x32xbf16>
    %cst_9 = arith.constant dense<0.000000e+00> : vector<64x32xf32>
    %23 = tpu.matmul %1, %22, %cst_9 {dimension_numbers = #tpu.dot_dimension_numbers<[1], [0], [0], [1], [0, 0, 1, 1], [], []>} : vector<64x64xbf16>, vector<64x32xbf16>, vector<64x32xf32> -> vector<64x32xf32>
    %24 = arith.truncf %23 : vector<64x32xf32> to vector<64x32xbf16>
    %cst_10 = arith.constant dense<0.000000e+00> : vector<64x32xf32>
    %25 = tpu.matmul %24, %14, %cst_10 {dimension_numbers = #tpu.dot_dimension_numbers<[1], [0], [0], [1], [0, 0, 1, 1], [], []>} : vector<64x32xbf16>, vector<32x32xbf16>, vector<64x32xf32> -> vector<64x32xf32>
    %26 = vector.broadcast %15 : vector<1x32xf32> to vector<64x32xf32>
    %27 = arith.addf %25, %26 : vector<64x32xf32>
    %cst_11 = arith.constant dense<0.000000e+00> : vector<64xf32>
    %28 = vector.multi_reduction <add>, %27, %cst_11 [1] : vector<64x32xf32> to vector<64xf32>
    %29 = vector.shape_cast %28 : vector<64xf32> to vector<64x1xf32>
    %cst_12 = arith.constant 3.200000e+01 : f32
    %30 = vector.broadcast %cst_12 : f32 to vector<64x1xf32>
    %31 = arith.divf %29, %30 : vector<64x1xf32>
    %32 = vector.broadcast %31 : vector<64x1xf32> to vector<64x32xf32>
    %33 = arith.subf %27, %32 : vector<64x32xf32>
    %34 = arith.mulf %33, %33 : vector<64x32xf32>
    %cst_13 = arith.constant dense<0.000000e+00> : vector<64xf32>
    %35 = vector.multi_reduction <add>, %34, %cst_13 [1] : vector<64x32xf32> to vector<64xf32>
    %36 = vector.shape_cast %35 : vector<64xf32> to vector<64x1xf32>
    %cst_14 = arith.constant 3.200000e+01 : f32
    %37 = vector.broadcast %cst_14 : f32 to vector<64x1xf32>
    %38 = arith.divf %36, %37 : vector<64x1xf32>
    %cst_15 = arith.constant 9.99999974E-6 : f32
    %39 = vector.broadcast %cst_15 : f32 to vector<64x1xf32>
    %40 = arith.addf %38, %39 : vector<64x1xf32>
    %41 = math.rsqrt %40 : vector<64x1xf32>
    %42 = vector.broadcast %41 : vector<64x1xf32> to vector<64x32xf32>
    %43 = arith.mulf %33, %42 : vector<64x32xf32>
    %44 = vector.broadcast %16 : vector<1x32xf32> to vector<64x32xf32>
    %45 = arith.mulf %43, %44 : vector<64x32xf32>
    %46 = vector.broadcast %17 : vector<1x32xf32> to vector<64x32xf32>
    %47 = arith.addf %45, %46 : vector<64x32xf32>
    %cst_16 = arith.constant 0.000000e+00 : f32
    %48 = vector.broadcast %cst_16 : f32 to vector<64x32xf32>
    %49 = arith.maximumf %47, %48 : vector<64x32xf32>
    %50 = arith.truncf %49 : vector<64x32xf32> to vector<64x32xbf16>
    %cst_17 = arith.constant dense<0.000000e+00> : vector<64x32xf32>
    %51 = tpu.matmul %50, %18, %cst_17 {dimension_numbers = #tpu.dot_dimension_numbers<[1], [0], [0], [1], [0, 0, 1, 1], [], []>} : vector<64x32xbf16>, vector<32x32xbf16>, vector<64x32xf32> -> vector<64x32xf32>
    %52 = vector.broadcast %19 : vector<1x32xf32> to vector<64x32xf32>
    %53 = arith.addf %51, %52 : vector<64x32xf32>
    %cst_18 = arith.constant dense<0.000000e+00> : vector<64xf32>
    %54 = vector.multi_reduction <add>, %53, %cst_18 [1] : vector<64x32xf32> to vector<64xf32>
    %55 = vector.shape_cast %54 : vector<64xf32> to vector<64x1xf32>
    %cst_19 = arith.constant 3.200000e+01 : f32
    %56 = vector.broadcast %cst_19 : f32 to vector<64x1xf32>
    %57 = arith.divf %55, %56 : vector<64x1xf32>
    %58 = vector.broadcast %57 : vector<64x1xf32> to vector<64x32xf32>
    %59 = arith.subf %53, %58 : vector<64x32xf32>
    %60 = arith.mulf %59, %59 : vector<64x32xf32>
    %cst_20 = arith.constant dense<0.000000e+00> : vector<64xf32>
    %61 = vector.multi_reduction <add>, %60, %cst_20 [1] : vector<64x32xf32> to vector<64xf32>
    %62 = vector.shape_cast %61 : vector<64xf32> to vector<64x1xf32>
    %cst_21 = arith.constant 3.200000e+01 : f32
    %63 = vector.broadcast %cst_21 : f32 to vector<64x1xf32>
    %64 = arith.divf %62, %63 : vector<64x1xf32>
    %cst_22 = arith.constant 9.99999974E-6 : f32
    %65 = vector.broadcast %cst_22 : f32 to vector<64x1xf32>
    %66 = arith.addf %64, %65 : vector<64x1xf32>
    %67 = math.rsqrt %66 : vector<64x1xf32>
    %68 = vector.broadcast %67 : vector<64x1xf32> to vector<64x32xf32>
    %69 = arith.mulf %59, %68 : vector<64x32xf32>
    %70 = vector.broadcast %20 : vector<1x32xf32> to vector<64x32xf32>
    %71 = arith.mulf %69, %70 : vector<64x32xf32>
    %72 = vector.broadcast %21 : vector<1x32xf32> to vector<64x32xf32>
    %73 = arith.addf %71, %72 : vector<64x32xf32>
    %cst_23 = arith.constant 0.000000e+00 : f32
    %74 = vector.broadcast %cst_23 : f32 to vector<64x32xf32>
    %75 = arith.maximumf %73, %74 : vector<64x32xf32>
    %76 = vector.extract_strided_slice %5 {offsets = [64, 0], sizes = [32, 32], strides = [1, 1]} : vector<192x32xbf16> to vector<32x32xbf16>
    %77 = vector.extract_strided_slice %6 {offsets = [7, 0], sizes = [1, 32], strides = [1, 1]} : vector<24x32xf32> to vector<1x32xf32>
    %78 = vector.extract_strided_slice %6 {offsets = [8, 0], sizes = [1, 32], strides = [1, 1]} : vector<24x32xf32> to vector<1x32xf32>
    %79 = vector.extract_strided_slice %6 {offsets = [9, 0], sizes = [1, 32], strides = [1, 1]} : vector<24x32xf32> to vector<1x32xf32>
    %80 = vector.extract_strided_slice %5 {offsets = [96, 0], sizes = [32, 32], strides = [1, 1]} : vector<192x32xbf16> to vector<32x32xbf16>
    %81 = vector.extract_strided_slice %6 {offsets = [10, 0], sizes = [1, 32], strides = [1, 1]} : vector<24x32xf32> to vector<1x32xf32>
    %82 = vector.extract_strided_slice %6 {offsets = [11, 0], sizes = [1, 32], strides = [1, 1]} : vector<24x32xf32> to vector<1x32xf32>
    %83 = vector.extract_strided_slice %6 {offsets = [12, 0], sizes = [1, 32], strides = [1, 1]} : vector<24x32xf32> to vector<1x32xf32>
    %84 = arith.truncf %75 : vector<64x32xf32> to vector<64x32xbf16>
    %cst_24 = arith.constant dense<0.000000e+00> : vector<64x32xf32>
    %85 = tpu.matmul %1, %84, %cst_24 {dimension_numbers = #tpu.dot_dimension_numbers<[1], [0], [0], [1], [0, 0, 1, 1], [], []>} : vector<64x64xbf16>, vector<64x32xbf16>, vector<64x32xf32> -> vector<64x32xf32>
    %86 = arith.truncf %85 : vector<64x32xf32> to vector<64x32xbf16>
    %cst_25 = arith.constant dense<0.000000e+00> : vector<64x32xf32>
    %87 = tpu.matmul %86, %76, %cst_25 {dimension_numbers = #tpu.dot_dimension_numbers<[1], [0], [0], [1], [0, 0, 1, 1], [], []>} : vector<64x32xbf16>, vector<32x32xbf16>, vector<64x32xf32> -> vector<64x32xf32>
    %88 = vector.broadcast %77 : vector<1x32xf32> to vector<64x32xf32>
    %89 = arith.addf %87, %88 : vector<64x32xf32>
    %cst_26 = arith.constant dense<0.000000e+00> : vector<64xf32>
    %90 = vector.multi_reduction <add>, %89, %cst_26 [1] : vector<64x32xf32> to vector<64xf32>
    %91 = vector.shape_cast %90 : vector<64xf32> to vector<64x1xf32>
    %cst_27 = arith.constant 3.200000e+01 : f32
    %92 = vector.broadcast %cst_27 : f32 to vector<64x1xf32>
    %93 = arith.divf %91, %92 : vector<64x1xf32>
    %94 = vector.broadcast %93 : vector<64x1xf32> to vector<64x32xf32>
    %95 = arith.subf %89, %94 : vector<64x32xf32>
    %96 = arith.mulf %95, %95 : vector<64x32xf32>
    %cst_28 = arith.constant dense<0.000000e+00> : vector<64xf32>
    %97 = vector.multi_reduction <add>, %96, %cst_28 [1] : vector<64x32xf32> to vector<64xf32>
    %98 = vector.shape_cast %97 : vector<64xf32> to vector<64x1xf32>
    %cst_29 = arith.constant 3.200000e+01 : f32
    %99 = vector.broadcast %cst_29 : f32 to vector<64x1xf32>
    %100 = arith.divf %98, %99 : vector<64x1xf32>
    %cst_30 = arith.constant 9.99999974E-6 : f32
    %101 = vector.broadcast %cst_30 : f32 to vector<64x1xf32>
    %102 = arith.addf %100, %101 : vector<64x1xf32>
    %103 = math.rsqrt %102 : vector<64x1xf32>
    %104 = vector.broadcast %103 : vector<64x1xf32> to vector<64x32xf32>
    %105 = arith.mulf %95, %104 : vector<64x32xf32>
    %106 = vector.broadcast %78 : vector<1x32xf32> to vector<64x32xf32>
    %107 = arith.mulf %105, %106 : vector<64x32xf32>
    %108 = vector.broadcast %79 : vector<1x32xf32> to vector<64x32xf32>
    %109 = arith.addf %107, %108 : vector<64x32xf32>
    %cst_31 = arith.constant 0.000000e+00 : f32
    %110 = vector.broadcast %cst_31 : f32 to vector<64x32xf32>
    %111 = arith.maximumf %109, %110 : vector<64x32xf32>
    %112 = arith.truncf %111 : vector<64x32xf32> to vector<64x32xbf16>
    %cst_32 = arith.constant dense<0.000000e+00> : vector<64x32xf32>
    %113 = tpu.matmul %112, %80, %cst_32 {dimension_numbers = #tpu.dot_dimension_numbers<[1], [0], [0], [1], [0, 0, 1, 1], [], []>} : vector<64x32xbf16>, vector<32x32xbf16>, vector<64x32xf32> -> vector<64x32xf32>
    %114 = vector.broadcast %81 : vector<1x32xf32> to vector<64x32xf32>
    %115 = arith.addf %113, %114 : vector<64x32xf32>
    %cst_33 = arith.constant dense<0.000000e+00> : vector<64xf32>
    %116 = vector.multi_reduction <add>, %115, %cst_33 [1] : vector<64x32xf32> to vector<64xf32>
    %117 = vector.shape_cast %116 : vector<64xf32> to vector<64x1xf32>
    %cst_34 = arith.constant 3.200000e+01 : f32
    %118 = vector.broadcast %cst_34 : f32 to vector<64x1xf32>
    %119 = arith.divf %117, %118 : vector<64x1xf32>
    %120 = vector.broadcast %119 : vector<64x1xf32> to vector<64x32xf32>
    %121 = arith.subf %115, %120 : vector<64x32xf32>
    %122 = arith.mulf %121, %121 : vector<64x32xf32>
    %cst_35 = arith.constant dense<0.000000e+00> : vector<64xf32>
    %123 = vector.multi_reduction <add>, %122, %cst_35 [1] : vector<64x32xf32> to vector<64xf32>
    %124 = vector.shape_cast %123 : vector<64xf32> to vector<64x1xf32>
    %cst_36 = arith.constant 3.200000e+01 : f32
    %125 = vector.broadcast %cst_36 : f32 to vector<64x1xf32>
    %126 = arith.divf %124, %125 : vector<64x1xf32>
    %cst_37 = arith.constant 9.99999974E-6 : f32
    %127 = vector.broadcast %cst_37 : f32 to vector<64x1xf32>
    %128 = arith.addf %126, %127 : vector<64x1xf32>
    %129 = math.rsqrt %128 : vector<64x1xf32>
    %130 = vector.broadcast %129 : vector<64x1xf32> to vector<64x32xf32>
    %131 = arith.mulf %121, %130 : vector<64x32xf32>
    %132 = vector.broadcast %82 : vector<1x32xf32> to vector<64x32xf32>
    %133 = arith.mulf %131, %132 : vector<64x32xf32>
    %134 = vector.broadcast %83 : vector<1x32xf32> to vector<64x32xf32>
    %135 = arith.addf %133, %134 : vector<64x32xf32>
    %cst_38 = arith.constant 0.000000e+00 : f32
    %136 = vector.broadcast %cst_38 : f32 to vector<64x32xf32>
    %137 = arith.maximumf %135, %136 : vector<64x32xf32>
    %138 = vector.broadcast %4 : vector<64x1xf32> to vector<64x32xf32>
    %139 = arith.mulf %137, %138 : vector<64x32xf32>
    %140 = vector.extract_strided_slice %5 {offsets = [128, 0], sizes = [32, 32], strides = [1, 1]} : vector<192x32xbf16> to vector<32x32xbf16>
    %141 = vector.extract_strided_slice %6 {offsets = [13, 0], sizes = [1, 32], strides = [1, 1]} : vector<24x32xf32> to vector<1x32xf32>
    %142 = vector.extract_strided_slice %6 {offsets = [14, 0], sizes = [1, 32], strides = [1, 1]} : vector<24x32xf32> to vector<1x32xf32>
    %143 = vector.extract_strided_slice %6 {offsets = [15, 0], sizes = [1, 32], strides = [1, 1]} : vector<24x32xf32> to vector<1x32xf32>
    %144 = vector.extract_strided_slice %5 {offsets = [160, 0], sizes = [32, 32], strides = [1, 1]} : vector<192x32xbf16> to vector<32x32xbf16>
    %145 = vector.extract_strided_slice %6 {offsets = [16, 0], sizes = [1, 32], strides = [1, 1]} : vector<24x32xf32> to vector<1x32xf32>
    %146 = arith.truncf %139 : vector<64x32xf32> to vector<64x32xbf16>
    %cst_39 = arith.constant dense<0.000000e+00> : vector<64x32xf32>
    %147 = tpu.matmul %1, %146, %cst_39 {dimension_numbers = #tpu.dot_dimension_numbers<[1], [0], [0], [1], [0, 0, 1, 1], [], []>} : vector<64x64xbf16>, vector<64x32xbf16>, vector<64x32xf32> -> vector<64x32xf32>
    %148 = arith.truncf %147 : vector<64x32xf32> to vector<64x32xbf16>
    %cst_40 = arith.constant dense<0.000000e+00> : vector<64x32xf32>
    %149 = tpu.matmul %148, %140, %cst_40 {dimension_numbers = #tpu.dot_dimension_numbers<[1], [0], [0], [1], [0, 0, 1, 1], [], []>} : vector<64x32xbf16>, vector<32x32xbf16>, vector<64x32xf32> -> vector<64x32xf32>
    %150 = vector.broadcast %141 : vector<1x32xf32> to vector<64x32xf32>
    %151 = arith.addf %149, %150 : vector<64x32xf32>
    %cst_41 = arith.constant dense<0.000000e+00> : vector<64xf32>
    %152 = vector.multi_reduction <add>, %151, %cst_41 [1] : vector<64x32xf32> to vector<64xf32>
    %153 = vector.shape_cast %152 : vector<64xf32> to vector<64x1xf32>
    %cst_42 = arith.constant 3.200000e+01 : f32
    %154 = vector.broadcast %cst_42 : f32 to vector<64x1xf32>
    %155 = arith.divf %153, %154 : vector<64x1xf32>
    %156 = vector.broadcast %155 : vector<64x1xf32> to vector<64x32xf32>
    %157 = arith.subf %151, %156 : vector<64x32xf32>
    %158 = arith.mulf %157, %157 : vector<64x32xf32>
    %cst_43 = arith.constant dense<0.000000e+00> : vector<64xf32>
    %159 = vector.multi_reduction <add>, %158, %cst_43 [1] : vector<64x32xf32> to vector<64xf32>
    %160 = vector.shape_cast %159 : vector<64xf32> to vector<64x1xf32>
    %cst_44 = arith.constant 3.200000e+01 : f32
    %161 = vector.broadcast %cst_44 : f32 to vector<64x1xf32>
    %162 = arith.divf %160, %161 : vector<64x1xf32>
    %cst_45 = arith.constant 9.99999974E-6 : f32
    %163 = vector.broadcast %cst_45 : f32 to vector<64x1xf32>
    %164 = arith.addf %162, %163 : vector<64x1xf32>
    %165 = math.rsqrt %164 : vector<64x1xf32>
    %166 = vector.broadcast %165 : vector<64x1xf32> to vector<64x32xf32>
    %167 = arith.mulf %157, %166 : vector<64x32xf32>
    %168 = vector.broadcast %142 : vector<1x32xf32> to vector<64x32xf32>
    %169 = arith.mulf %167, %168 : vector<64x32xf32>
    %170 = vector.broadcast %143 : vector<1x32xf32> to vector<64x32xf32>
    %171 = arith.addf %169, %170 : vector<64x32xf32>
    %cst_46 = arith.constant 0.000000e+00 : f32
    %172 = vector.broadcast %cst_46 : f32 to vector<64x32xf32>
    %173 = arith.maximumf %171, %172 : vector<64x32xf32>
    %174 = arith.truncf %173 : vector<64x32xf32> to vector<64x32xbf16>
    %cst_47 = arith.constant dense<0.000000e+00> : vector<64x32xf32>
    %175 = tpu.matmul %174, %144, %cst_47 {dimension_numbers = #tpu.dot_dimension_numbers<[1], [0], [0], [1], [0, 0, 1, 1], [], []>} : vector<64x32xbf16>, vector<32x32xbf16>, vector<64x32xf32> -> vector<64x32xf32>
    %176 = vector.broadcast %145 : vector<1x32xf32> to vector<64x32xf32>
    %177 = arith.addf %175, %176 : vector<64x32xf32>
    %178 = arith.mulf %177, %177 : vector<64x32xf32>
    %cst_48 = arith.constant dense<0.000000e+00> : vector<64xf32>
    %179 = vector.multi_reduction <add>, %178, %cst_48 [1] : vector<64x32xf32> to vector<64xf32>
    %180 = vector.shape_cast %179 : vector<64xf32> to vector<64x1xf32>
    %cst_49 = arith.constant 1.000000e-24 : f32
    %181 = vector.broadcast %cst_49 : f32 to vector<64x1xf32>
    %182 = arith.maximumf %180, %181 : vector<64x1xf32>
    %183 = math.rsqrt %182 : vector<64x1xf32>
    %184 = arith.mulf %0, %0 : vector<64x32xf32>
    %cst_50 = arith.constant dense<0.000000e+00> : vector<64xf32>
    %185 = vector.multi_reduction <add>, %184, %cst_50 [1] : vector<64x32xf32> to vector<64xf32>
    %186 = vector.shape_cast %185 : vector<64xf32> to vector<64x1xf32>
    %cst_51 = arith.constant 1.000000e-24 : f32
    %187 = vector.broadcast %cst_51 : f32 to vector<64x1xf32>
    %188 = arith.maximumf %186, %187 : vector<64x1xf32>
    %189 = math.rsqrt %188 : vector<64x1xf32>
    %190 = arith.mulf %177, %0 : vector<64x32xf32>
    %cst_52 = arith.constant dense<0.000000e+00> : vector<64xf32>
    %191 = vector.multi_reduction <add>, %190, %cst_52 [1] : vector<64x32xf32> to vector<64xf32>
    %192 = vector.shape_cast %191 : vector<64xf32> to vector<64x1xf32>
    %193 = arith.mulf %192, %183 : vector<64x1xf32>
    %194 = arith.mulf %193, %189 : vector<64x1xf32>
    %cst_53 = arith.constant 1.000000e+00 : f32
    %195 = vector.broadcast %cst_53 : f32 to vector<64x1xf32>
    %196 = arith.subf %195, %194 : vector<64x1xf32>
    %197 = arith.mulf %196, %196 : vector<64x1xf32>
    %198 = arith.mulf %197, %196 : vector<64x1xf32>
    %199 = arith.mulf %198, %2 : vector<64x1xf32>
    %cst_54 = arith.constant dense<0.000000e+00> : vector<1xf32>
    %200 = vector.multi_reduction <add>, %199, %cst_54 [0] : vector<64x1xf32> to vector<1xf32>
    %201 = vector.shape_cast %200 : vector<1xf32> to vector<1x1xf32>
    %cst_55 = arith.constant 3.125000e-02 : f32
    %202 = vector.broadcast %cst_55 : f32 to vector<1x1xf32>
    %203 = arith.mulf %201, %202 : vector<1x1xf32>
    %c0_56 = arith.constant 0 : index
    %c0_57 = arith.constant 0 : index
    %204 = vector.load %arg5[%c0_56, %c0_57] : memref<1x1xf32, #tpu.memory_space<vmem>>, vector<1x1xf32>
    tpu.vector_store %arg5[%c0_56, %c0_57], %203 {strides = array<i32>} : memref<1x1xf32, #tpu.memory_space<vmem>>, vector<1x1xf32>,
    return
  }
}

</mosaic_0001>

<llo_original>
// kernel: graphmae_forward.1
$region0: #{graphmae_forward.1}
  #allocation0 [shape = 'u32[]', space=smem, size = 0x4, offset = 0x4, fixed_abs, tag = 'smem constant byte address 0x4 - core index']
  #allocation1 [shape = 'u32[144,128]{1,0:T(1,128)}', space=vmem, size = 0x12000, scoped, tag = 'internal scratch']
  %s0 = inlined_call_operand.vmem [shape: f32[64,32], index: 0, kind: input, shape index: {}]
  %s1 = inlined_call_operand.vmem [shape: bf16[64,64], index: 1, kind: input, shape index: {}]
  %s2 = inlined_call_operand.vmem [shape: f32[64,1], index: 2, kind: input, shape index: {}]
  %s3 = inlined_call_operand.vmem [shape: bf16[192,32], index: 3, kind: input, shape index: {}]
  %s4 = inlined_call_operand.vmem [shape: f32[24,32], index: 4, kind: input, shape index: {}]
  %s5 = inlined_call_operand.hbm [shape: f32[1,1], index: 5, kind: output, shape index: {}]
  %s6 = sld [smem:[#allocation0]]
  $region30: #{graphmae_forward.1} parent=0
    _
  %s8 = ssub.s32 1, %s6
  %s9 = scalar_select 0, %s8, %s6
  $region1: #{graphmae_forward.1} parent=0
    #allocation2 [shape = 'u8[512]{0}', space=vmem, size = 0x400, scoped, tag = 'output window, operand 0, single buffered']
    #allocation3 [shape = 's32[1]{0}', space=sflag, size = 0x4, scoped, tag = 'scoped memory for graphmae_forward.1']
    %10 = vsyncpa [#allocation3], 0
    // Predicated region
    $region2: #{graphmae_forward.1} parent=1 // pred_check
      _
    $region3: #{graphmae_forward.1} parent=1 // pred_check_branch
      %12 = sbr.rel (0) target = $region5
    $region4: #{graphmae_forward.1} parent=1 // pred_region
      _
    $region5: #{graphmae_forward.1} parent=1 // pred_fallthru
      _
    // Predicated region
    $region6: #{graphmae_forward.1} parent=1 // pred_check
      _
    $region7: #{graphmae_forward.1} parent=1 // pred_check_branch
      %14 = sbr.rel (0) target = $region9
    $region8: #{graphmae_forward.1} parent=1 // pred_region
      _
    $region9: #{graphmae_forward.1} parent=1 // pred_fallthru
      _
    // Predicated region
    $region10: #{graphmae_forward.1} parent=1 // pred_check
      _
    $region11: #{graphmae_forward.1} parent=1 // pred_check_branch
      %16 = sbr.rel (0) target = $region13
    $region12: #{graphmae_forward.1} parent=1 // pred_region
      _
    $region13: #{graphmae_forward.1} parent=1 // pred_fallthru
      _
    // Predicated region
    $region14: #{graphmae_forward.1} parent=1 // pred_check
      _
    $region15: #{graphmae_forward.1} parent=1 // pred_check_branch
      %18 = sbr.rel (0) target = $region17
    $region16: #{graphmae_forward.1} parent=1 // pred_region
      _
    $region17: #{graphmae_forward.1} parent=1 // pred_fallthru
      _
    // Predicated region
    $region18: #{graphmae_forward.1} parent=1 // pred_check
      _
    $region19: #{graphmae_forward.1} parent=1 // pred_check_branch
      %20 = sbr.rel (0) target = $region21
    $region20: #{graphmae_forward.1} parent=1 // pred_region
      _
    $region21: #{graphmae_forward.1} parent=1 // pred_fallthru
      _
    %v22 = vld [vmem:[%s0] sm:$0xff]
    %v23 = vld [vmem:[%s0 + $0x8] sm:$0xff]
    %v24 = vld [vmem:[%s0 + $0x10] sm:$0xff]
    %v25 = vld [vmem:[%s0 + $0x18] sm:$0xff]
    %v26 = vld [vmem:[%s0 + $0x20] sm:$0xff]
    %v27 = vld [vmem:[%s0 + $0x28] sm:$0xff]
    %v28 = vld [vmem:[%s0 + $0x30] sm:$0xff]
    %v29 = vld [vmem:[%s0 + $0x38] sm:$0xff]
    %v30 = vld [vmem:[%s1] sm:$0xf]
    %v31 = vld [vmem:[%s1 + $0x4] sm:$0xf]
    %v32 = vld [vmem:[%s1 + $0x8] sm:$0xf]
    %v33 = vld [vmem:[%s1 + $0xc] sm:$0xf]
    %v34 = vld [vmem:[%s1 + $0x10] sm:$0xf]
    %v35 = vld [vmem:[%s1 + $0x14] sm:$0xf]
    %v36 = vld [vmem:[%s1 + $0x18] sm:$0xf]
    %v37 = vld [vmem:[%s1 + $0x1c] sm:$0xf]
    %v38 = vld [vmem:[%s2] sm:$0xff]
    %v39 = vld [vmem:[%s2 + $0x8] sm:$0xff]
    %v40 = vld [vmem:[%s2 + $0x10] sm:$0xff]
    %v41 = vld [vmem:[%s2 + $0x18] sm:$0xff]
    %v42 = vld [vmem:[%s2 + $0x20] sm:$0xff]
    %v43 = vld [vmem:[%s2 + $0x28] sm:$0xff]
    %v44 = vld [vmem:[%s2 + $0x30] sm:$0xff]
    %v45 = vld [vmem:[%s2 + $0x38] sm:$0xff]
    %v46 = vsub.f32 1.0, %v38
    %v47 = vsub.f32 1.0, %v39
    %v48 = vsub.f32 1.0, %v40
    %v49 = vsub.f32 1.0, %v41
    %v50 = vsub.f32 1.0, %v42
    %v51 = vsub.f32 1.0, %v43
    %v52 = vsub.f32 1.0, %v44
    %v53 = vsub.f32 1.0, %v45
    %v54 = vld [vmem:[%s3] sm:$0xf]
    %v55 = vld [vmem:[%s3 + $0x4] sm:$0xf]
    %v56 = vld [vmem:[%s3 + $0x8] sm:$0xf]
    %v57 = vld [vmem:[%s3 + $0xc] sm:$0xf]
    %v58 = vld [vmem:[%s3 + $0x10] sm:$0xf]
    %v59 = vld [vmem:[%s3 + $0x14] sm:$0xf]
    %v60 = vld [vmem:[%s3 + $0x18] sm:$0xf]
    %v61 = vld [vmem:[%s3 + $0x1c] sm:$0xf]
    %v62 = vld [vmem:[%s3 + $0x20] sm:$0xf]
    %v63 = vld [vmem:[%s3 + $0x24] sm:$0xf]
    %v64 = vld [vmem:[%s3 + $0x28] sm:$0xf]
    %v65 = vld [vmem:[%s3 + $0x2c] sm:$0xf]
    %v66 = vld [vmem:[%s3 + $0x30] sm:$0xf]
    %v67 = vld [vmem:[%s3 + $0x34] sm:$0xf]
    %v68 = vld [vmem:[%s3 + $0x38] sm:$0xf]
    %v69 = vld [vmem:[%s3 + $0x3c] sm:$0xf]
    %v70 = vld [vmem:[%s3 + $0x40] sm:$0xf]
    %v71 = vld [vmem:[%s3 + $0x44] sm:$0xf]
    %v72 = vld [vmem:[%s3 + $0x48] sm:$0xf]
    %v73 = vld [vmem:[%s3 + $0x4c] sm:$0xf]
    %v74 = vld [vmem:[%s3 + $0x50] sm:$0xf]
    %v75 = vld [vmem:[%s3 + $0x54] sm:$0xf]
    %v76 = vld [vmem:[%s3 + $0x58] sm:$0xf]
    %v77 = vld [vmem:[%s3 + $0x5c] sm:$0xf]
    %v78 = vld [vmem:[%s4] sm:$0xff]
    %v79 = vld [vmem:[%s4 + $0x8] sm:$0xff]
    %v80 = vld [vmem:[%s4 + $0x10] sm:$0xff]
    %82 = vset.pattern.permute.xlu0 0
    %83 = vperm.xlu0 %82, %v46
    %v84 = vpop.permute.xlu0 %83
    %87 = vset.pattern.permute.xlu0 0
    %88 = vperm.xlu0 %87, %v47
    %v89 = vpop.permute.xlu0 %88
    %92 = vset.pattern.permute.xlu0 0
    %93 = vperm.xlu0 %92, %v48
    %v94 = vpop.permute.xlu0 %93
    %97 = vset.pattern.permute.xlu0 0
    %98 = vperm.xlu0 %97, %v49
    %v99 = vpop.permute.xlu0 %98
    %102 = vset.pattern.permute.xlu0 0
    %103 = vperm.xlu0 %102, %v50
    %v104 = vpop.permute.xlu0 %103
    %107 = vset.pattern.permute.xlu0 0
    %108 = vperm.xlu0 %107, %v51
    %v109 = vpop.permute.xlu0 %108
    %112 = vset.pattern.permute.xlu0 0
    %113 = vperm.xlu0 %112, %v52
    %v114 = vpop.permute.xlu0 %113
    %117 = vset.pattern.permute.xlu0 0
    %118 = vperm.xlu0 %117, %v53
    %v119 = vpop.permute.xlu0 %118
    %v121 = vmul.f32 %v22, %v84
    %v122 = vmul.f32 %v23, %v89
    %v123 = vmul.f32 %v24, %v94
    %v124 = vmul.f32 %v25, %v99
    %v125 = vmul.f32 %v26, %v104
    %v126 = vmul.f32 %v27, %v109
    %v127 = vmul.f32 %v28, %v114
    %v128 = vmul.f32 %v29, %v119
    %v129 = vlaneseq
    %v130 = vshrl.u32 %v129, 7
    %v131 = vsub.s32 0, %v130
    %v132 = vrot.slane %v78, %v131
    %134 = vset.pattern.permute.xlu0 0
    %135 = vperm.xlu0 %134, %v38
    %v136 = vpop.permute.xlu0 %135
    %139 = vset.pattern.permute.xlu0 0
    %140 = vperm.xlu0 %139, %v39
    %v141 = vpop.permute.xlu0 %140
    %144 = vset.pattern.permute.xlu0 0
    %145 = vperm.xlu0 %144, %v40
    %v146 = vpop.permute.xlu0 %145
    %149 = vset.pattern.permute.xlu0 0
    %150 = vperm.xlu0 %149, %v41
    %v151 = vpop.permute.xlu0 %150
    %154 = vset.pattern.permute.xlu0 0
    %155 = vperm.xlu0 %154, %v42
    %v156 = vpop.permute.xlu0 %155
    %159 = vset.pattern.permute.xlu0 0
    %160 = vperm.xlu0 %159, %v43
    %v161 = vpop.permute.xlu0 %160
    %164 = vset.pattern.permute.xlu0 0
    %165 = vperm.xlu0 %164, %v44
    %v166 = vpop.permute.xlu0 %165
    %169 = vset.pattern.permute.xlu0 0
    %170 = vperm.xlu0 %169, %v45
    %v171 = vpop.permute.xlu0 %170
    %v173 = vmul.f32 %v132, %v136
    %v174 = vmul.f32 %v132, %v141
    %v175 = vmul.f32 %v132, %v146
    %v176 = vmul.f32 %v132, %v151
    %v177 = vmul.f32 %v132, %v156
    %v178 = vmul.f32 %v132, %v161
    %v179 = vmul.f32 %v132, %v166
    %v180 = vmul.f32 %v132, %v171
    %v181 = vadd.f32 %v121, %v173
    %v182 = vadd.f32 %v122, %v174
    %v183 = vadd.f32 %v123, %v175
    %v184 = vadd.f32 %v124, %v176
    %v185 = vadd.f32 %v125, %v177
    %v186 = vadd.f32 %v126, %v178
    %v187 = vadd.f32 %v127, %v179
    %v188 = vadd.f32 %v128, %v180
    %v189 = vpack.c.bf16 %v182, %v181
    %v190 = vpack.c.bf16 %v184, %v183
    %v191 = vpack.c.bf16 %v186, %v185
    %v192 = vpack.c.bf16 %v188, %v187
    %v201 = vunpack.c.l.b16 %v30
    %v202 = vunpack.c.l.b16 %v31
    %v203 = vunpack.c.l.b16 %v32
    %v204 = vunpack.c.l.b16 %v33
    %v205 = vunpack.c.l.b16 %v34
    %v206 = vunpack.c.l.b16 %v35
    %v207 = vunpack.c.l.b16 %v36
    %v208 = vunpack.c.l.b16 %v37
    %v209 = vpack.c.b16 %v202, %v201
    %v210 = vpack.c.b16 %v204, %v203
    %v211 = vpack.c.b16 %v206, %v205
    %v212 = vpack.c.b16 %v208, %v207
    %vm213 = vcmask 523264
    %v215 = vsel %vm213, %v209, 0
    %v218 = vsel %vm213, %v210, 0
    %v221 = vsel %vm213, %v211, 0
    %v224 = vsel %vm213, %v212, 0
    %226 = vmatprep.subr.bf16.mxu0 0
    %227 = vmatpush1.bf16.msra.mxu0 %v189
    %228 = vmatprep.subr.bf16.mxu0 0
    %229 = vmatpush1.bf16.msra.mxu0 %v190
    %230 = vmatprep.subr.bf16.mxu0 0
    %231 = vmatpush1.bf16.msra.mxu0 %v191
    %232 = vmatprep.subr.bf16.mxu0 0
    %233 = vmatpush1.bf16.msra.mxu0 %v192
    %234 = vmatprep.subr.bf16.mxu0 0
    %235 = vmatpush1.bf16.msra.mxu0 0
    %236 = vmatprep.subr.bf16.mxu0 0
    %237 = vmatpush1.bf16.msra.mxu0 0
    %238 = vmatprep.subr.bf16.mxu0 0
    %239 = vmatpush1.bf16.msra.mxu0 0
    %240 = vmatprep.subr.bf16.mxu0 0
    %241 = vmatpush1.bf16.msra.mxu0 0
    %242 = vmatprep.subr.bf16.mxu0 0
    %243 = vmatpush1.bf16.msra.mxu0 0
    %244 = vmatprep.subr.bf16.mxu0 0
    %245 = vmatpush1.bf16.msra.mxu0 0
    %246 = vmatprep.subr.bf16.mxu0 0
    %247 = vmatpush1.bf16.msra.mxu0 0
    %248 = vmatprep.subr.bf16.mxu0 0
    %249 = vmatpush1.bf16.msra.mxu0 0
    %250 = vmatprep.subr.bf16.mxu0 0
    %251 = vmatpush1.bf16.msra.mxu0 0
    %252 = vmatprep.subr.bf16.mxu0 0
    %253 = vmatpush1.bf16.msra.mxu0 0
    %254 = vmatprep.subr.bf16.mxu0 0
    %255 = vmatpush1.bf16.msra.mxu0 0
    %256 = vmatprep.subr.bf16.mxu0 0
    %257 = vmatpush1.bf16.msra.mxu0 0
    %258 = vmatprep.mubr.bf16.mxu0 0
    %259 = vmatmul.mubr.bf16.gmra.mrb[0].mxu0 %v215
    %v260 = vpop.f32.mrb[0].mxu0
    %v261 = vadd.f32 0.0, %v260
    %v262 = vpop.f32.mrb[0].mxu0
    %v263 = vpop.f32.mrb[0].mxu0
    %v264 = vadd.f32 0.0, %v263
    %v265 = vpop.f32.mrb[0].mxu0
    %266 = vmatprep.mubr.bf16.mxu0 0
    %267 = vmatmul.mubr.bf16.gmra.mrb[0].mxu0 %v218
    %v268 = vpop.f32.mrb[0].mxu0
    %v269 = vadd.f32 0.0, %v268
    %v270 = vpop.f32.mrb[0].mxu0
    %v271 = vpop.f32.mrb[0].mxu0
    %v272 = vadd.f32 0.0, %v271
    %v273 = vpop.f32.mrb[0].mxu0
    %274 = vmatprep.mubr.bf16.mxu0 0
    %275 = vmatmul.mubr.bf16.gmra.mrb[0].mxu0 %v221
    %v276 = vpop.f32.mrb[0].mxu0
    %v277 = vadd.f32 0.0, %v276
    %v278 = vpop.f32.mrb[0].mxu0
    %v279 = vpop.f32.mrb[0].mxu0
    %v280 = vadd.f32 0.0, %v279
    %v281 = vpop.f32.mrb[0].mxu0
    %282 = vmatprep.mubr.bf16.mxu0 0
    %283 = vmatmul.mubr.bf16.gmra.mrb[0].mxu0 %v224
    %v284 = vpop.f32.mrb[0].mxu0
    %v285 = vadd.f32 0.0, %v284
    %v286 = vpop.f32.mrb[0].mxu0
    %v287 = vpop.f32.mrb[0].mxu0
    %v288 = vadd.f32 0.0, %v287
    %v289 = vpop.f32.mrb[0].mxu0
    %290 = vdwg.mxu0
    %v291 = vpack.c.bf16 %v264, %v261
    %v292 = vpack.c.bf16 %v272, %v269
    %v293 = vpack.c.bf16 %v280, %v277
    %v294 = vpack.c.bf16 %v288, %v285
    %v295 = vlaneseq
    %v296 = vshrl.u32 %v295, 7
    %v297 = vsub.s32 1, %v296
    %v298 = vrot.slane %v78, %v297
    %v303 = vunpack.c.l.b16 %v54
    %v304 = vunpack.c.l.b16 %v55
    %v305 = vunpack.c.l.b16 %v56
    %v306 = vunpack.c.l.b16 %v57
    %v307 = vpack.c.b16 %v304, %v303
    %v308 = vpack.c.b16 %v306, %v305
    %vm311 = vcmask 261120
    %v313 = vsel %vm311, %v291, 0
    %v316 = vsel %vm311, %v292, 0
    %v319 = vsel %vm311, %v293, 0
    %v322 = vsel %vm311, %v294, 0
    %324 = vmatprep.subr.bf16.mxu0 0
    %325 = vmatpush1.bf16.msra.mxu0 %v307
    %326 = vmatprep.subr.bf16.mxu0 0
    %327 = vmatpush1.bf16.msra.mxu0 %v308
    %328 = vmatprep.subr.bf16.mxu0 0
    %329 = vmatpush1.bf16.msra.mxu0 0
    %330 = vmatprep.subr.bf16.mxu0 0
    %331 = vmatpush1.bf16.msra.mxu0 0
    %332 = vmatprep.subr.bf16.mxu0 0
    %333 = vmatpush1.bf16.msra.mxu0 0
    %334 = vmatprep.subr.bf16.mxu0 0
    %335 = vmatpush1.bf16.msra.mxu0 0
    %336 = vmatprep.subr.bf16.mxu0 0
    %337 = vmatpush1.bf16.msra.mxu0 0
    %338 = vmatprep.subr.bf16.mxu0 0
    %339 = vmatpush1.bf16.msra.mxu0 0
    %340 = vmatprep.subr.bf16.mxu0 0
    %341 = vmatpush1.bf16.msra.mxu0 0
    %342 = vmatprep.subr.bf16.mxu0 0
    %343 = vmatpush1.bf16.msra.mxu0 0
    %344 = vmatprep.subr.bf16.mxu0 0
    %345 = vmatpush1.bf16.msra.mxu0 0
    %346 = vmatprep.subr.bf16.mxu0 0
    %347 = vmatpush1.bf16.msra.mxu0 0
    %348 = vmatprep.subr.bf16.mxu0 0
    %349 = vmatpush1.bf16.msra.mxu0 0
    %350 = vmatprep.subr.bf16.mxu0 0
    %351 = vmatpush1.bf16.msra.mxu0 0
    %352 = vmatprep.subr.bf16.mxu0 0
    %353 = vmatpush1.bf16.msra.mxu0 0
    %354 = vmatprep.subr.bf16.mxu0 0
    %355 = vmatpush1.bf16.msra.mxu0 0
    %356 = vmatprep.mubr.bf16.mxu0 0
    %357 = vmatmul.mubr.bf16.gmra.mrb[0].mxu0 %v313
    %v358 = vpop.f32.mrb[0].mxu0
    %v359 = vadd.f32 %v298, %v358
    %v360 = vpop.f32.mrb[0].mxu0
    %v361 = vpop.f32.mrb[0].mxu0
    %v362 = vadd.f32 %v298, %v361
    %v363 = vpop.f32.mrb[0].mxu0
    %364 = vmatprep.mubr.bf16.mxu0 0
    %365 = vmatmul.mubr.bf16.gmra.mrb[0].mxu0 %v316
    %v366 = vpop.f32.mrb[0].mxu0
    %v367 = vadd.f32 %v298, %v366
    %v368 = vpop.f32.mrb[0].mxu0
    %v369 = vpop.f32.mrb[0].mxu0
    %v370 = vadd.f32 %v298, %v369
    %v371 = vpop.f32.mrb[0].mxu0
    %372 = vmatprep.mubr.bf16.mxu0 0
    %373 = vmatmul.mubr.bf16.gmra.mrb[0].mxu0 %v319
    %v374 = vpop.f32.mrb[0].mxu0
    %v375 = vadd.f32 %v298, %v374
    %v376 = vpop.f32.mrb[0].mxu0
    %v377 = vpop.f32.mrb[0].mxu0
    %v378 = vadd.f32 %v298, %v377
    %v379 = vpop.f32.mrb[0].mxu0
    %380 = vmatprep.mubr.bf16.mxu0 0
    %381 = vmatmul.mubr.bf16.gmra.mrb[0].mxu0 %v322
    %v382 = vpop.f32.mrb[0].mxu0
    %v383 = vadd.f32 %v298, %v382
    %v384 = vpop.f32.mrb[0].mxu0
    %v385 = vpop.f32.mrb[0].mxu0
    %v386 = vadd.f32 %v298, %v385
    %v387 = vpop.f32.mrb[0].mxu0
    %388 = vdwg.mxu0
    %v389 = vsel %vm311, %v359, 0.0
    %390 = vadd.xlane.f32.xlu0 %v389
    %v391 = vpop.xlane.xlu0 %390
    %v392 = vsel %vm311, %v362, 0.0
    %393 = vadd.xlane.f32.xlu0 %v392
    %v394 = vpop.xlane.xlu0 %393
    %v395 = vsel %vm311, %v367, 0.0
    %396 = vadd.xlane.f32.xlu0 %v395
    %v397 = vpop.xlane.xlu0 %396
    %v398 = vsel %vm311, %v370, 0.0
    %399 = vadd.xlane.f32.xlu0 %v398
    %v400 = vpop.xlane.xlu0 %399
    %v401 = vsel %vm311, %v375, 0.0
    %402 = vadd.xlane.f32.xlu0 %v401
    %v403 = vpop.xlane.xlu0 %402
    %v404 = vsel %vm311, %v378, 0.0
    %405 = vadd.xlane.f32.xlu0 %v404
    %v406 = vpop.xlane.xlu0 %405
    %v407 = vsel %vm311, %v383, 0.0
    %408 = vadd.xlane.f32.xlu0 %v407
    %v409 = vpop.xlane.xlu0 %408
    %v410 = vsel %vm311, %v386, 0.0
    %411 = vadd.xlane.f32.xlu0 %v410
    %v412 = vpop.xlane.xlu0 %411
    %v413 = vrcp.pop 32.0
    %v414 = vmul.f32 %v391, %v413
    %v415 = vmul.f32 %v394, %v413
    %v416 = vmul.f32 %v397, %v413
    %v417 = vmul.f32 %v400, %v413
    %v418 = vmul.f32 %v403, %v413
    %v419 = vmul.f32 %v406, %v413
    %v420 = vmul.f32 %v409, %v413
    %v421 = vmul.f32 %v412, %v413
    %v422 = vsub.f32 %v359, %v414
    %v423 = vsub.f32 %v362, %v415
    %v424 = vsub.f32 %v367, %v416
    %v425 = vsub.f32 %v370, %v417
    %v426 = vsub.f32 %v375, %v418
    %v427 = vsub.f32 %v378, %v419
    %v428 = vsub.f32 %v383, %v420
    %v429 = vsub.f32 %v386, %v421
    %v430 = vmul.f32 %v422, %v422
    %v431 = vmul.f32 %v423, %v423
    %v432 = vmul.f32 %v424, %v424
    %v433 = vmul.f32 %v425, %v425
    %v434 = vmul.f32 %v426, %v426
    %v435 = vmul.f32 %v427, %v427
    %v436 = vmul.f32 %v428, %v428
    %v437 = vmul.f32 %v429, %v429
    %v438 = vsel %vm311, %v430, 0.0
    %439 = vadd.xlane.f32.xlu0 %v438
    %v440 = vpop.xlane.xlu0 %439
    %v441 = vsel %vm311, %v431, 0.0
    %442 = vadd.xlane.f32.xlu0 %v441
    %v443 = vpop.xlane.xlu0 %442
    %v444 = vsel %vm311, %v432, 0.0
    %445 = vadd.xlane.f32.xlu0 %v444
    %v446 = vpop.xlane.xlu0 %445
    %v447 = vsel %vm311, %v433, 0.0
    %448 = vadd.xlane.f32.xlu0 %v447
    %v449 = vpop.xlane.xlu0 %448
    %v450 = vsel %vm311, %v434, 0.0
    %451 = vadd.xlane.f32.xlu0 %v450
    %v452 = vpop.xlane.xlu0 %451
    %v453 = vsel %vm311, %v435, 0.0
    %454 = vadd.xlane.f32.xlu0 %v453
    %v455 = vpop.xlane.xlu0 %454
    %v456 = vsel %vm311, %v436, 0.0
    %457 = vadd.xlane.f32.xlu0 %v456
    %v458 = vpop.xlane.xlu0 %457
    %v459 = vsel %vm311, %v437, 0.0
    %460 = vadd.xlane.f32.xlu0 %v459
    %v461 = vpop.xlane.xlu0 %460
    %v462 = vmul.f32 %v440, %v413
    %v463 = vmul.f32 %v443, %v413
    %v464 = vmul.f32 %v446, %v413
    %v465 = vmul.f32 %v449, %v413
    %v466 = vmul.f32 %v452, %v413
    %v467 = vmul.f32 %v455, %v413
    %v468 = vmul.f32 %v458, %v413
    %v469 = vmul.f32 %v461, %v413
    %v470 = vadd.f32 %v462, 1e-05
    %v471 = vadd.f32 %v463, 1e-05
    %v472 = vadd.f32 %v464, 1e-05
    %v473 = vadd.f32 %v465, 1e-05
    %v474 = vadd.f32 %v466, 1e-05
    %v475 = vadd.f32 %v467, 1e-05
    %v476 = vadd.f32 %v468, 1e-05
    %v477 = vadd.f32 %v469, 1e-05
    %v478 = vrsqrt.pop %v470
    %v479 = vrsqrt.pop %v471
    %v480 = vrsqrt.pop %v472
    %v481 = vrsqrt.pop %v473
    %v482 = vrsqrt.pop %v474
    %v483 = vrsqrt.pop %v475
    %v484 = vrsqrt.pop %v476
    %v485 = vrsqrt.pop %v477
    %v486 = vmul.f32 %v422, %v478
    %v487 = vmul.f32 %v423, %v479
    %v488 = vmul.f32 %v424, %v480
    %v489 = vmul.f32 %v425, %v481
    %v490 = vmul.f32 %v426, %v482
    %v491 = vmul.f32 %v427, %v483
    %v492 = vmul.f32 %v428, %v484
    %v493 = vmul.f32 %v429, %v485
    %v494 = vlaneseq
    %v495 = vshrl.u32 %v494, 7
    %v496 = vsub.s32 2, %v495
    %v497 = vrot.slane %v78, %v496
    %v498 = vmul.f32 %v486, %v497
    %v499 = vmul.f32 %v487, %v497
    %v500 = vmul.f32 %v488, %v497
    %v501 = vmul.f32 %v489, %v497
    %v502 = vmul.f32 %v490, %v497
    %v503 = vmul.f32 %v491, %v497
    %v504 = vmul.f32 %v492, %v497
    %v505 = vmul.f32 %v493, %v497
    %v506 = vlaneseq
    %v507 = vshrl.u32 %v506, 7
    %v508 = vsub.s32 3, %v507
    %v509 = vrot.slane %v78, %v508
    %v510 = vadd.f32 %v498, %v509
    %v511 = vadd.f32 %v499, %v509
    %v512 = vadd.f32 %v500, %v509
    %v513 = vadd.f32 %v501, %v509
    %v514 = vadd.f32 %v502, %v509
    %v515 = vadd.f32 %v503, %v509
    %v516 = vadd.f32 %v504, %v509
    %v517 = vadd.f32 %v505, %v509
    %v518 = vmax.f32 %v510, 0.0
    %v519 = vmax.f32 %v511, 0.0
    %v520 = vmax.f32 %v512, 0.0
    %v521 = vmax.f32 %v513, 0.0
    %v522 = vmax.f32 %v514, 0.0
    %v523 = vmax.f32 %v515, 0.0
    %v524 = vmax.f32 %v516, 0.0
    %v525 = vmax.f32 %v517, 0.0
    %v526 = vpack.c.bf16 %v519, %v518
    %v527 = vpack.c.bf16 %v521, %v520
    %v528 = vpack.c.bf16 %v523, %v522
    %v529 = vpack.c.bf16 %v525, %v524
    %v530 = vlaneseq
    %v531 = vshrl.u32 %v530, 7
    %v532 = vsub.s32 4, %v531
    %v533 = vrot.slane %v78, %v532
    %v538 = vunpack.c.l.b16 %v58
    %v539 = vunpack.c.l.b16 %v59
    %v540 = vunpack.c.l.b16 %v60
    %v541 = vunpack.c.l.b16 %v61
    %v542 = vpack.c.b16 %v539, %v538
    %v543 = vpack.c.b16 %v541, %v540
    %v547 = vsel %vm311, %v526, 0
    %v550 = vsel %vm311, %v527, 0
    %v553 = vsel %vm311, %v528, 0
    %v556 = vsel %vm311, %v529, 0
    %558 = vmatprep.subr.bf16.mxu0 0
    %559 = vmatpush1.bf16.msra.mxu0 %v542
    %560 = vmatprep.subr.bf16.mxu0 0
    %561 = vmatpush1.bf16.msra.mxu0 %v543
    %562 = vmatprep.subr.bf16.mxu0 0
    %563 = vmatpush1.bf16.msra.mxu0 0
    %564 = vmatprep.subr.bf16.mxu0 0
    %565 = vmatpush1.bf16.msra.mxu0 0
    %566 = vmatprep.subr.bf16.mxu0 0
    %567 = vmatpush1.bf16.msra.mxu0 0
    %568 = vmatprep.subr.bf16.mxu0 0
    %569 = vmatpush1.bf16.msra.mxu0 0
    %570 = vmatprep.subr.bf16.mxu0 0
    %571 = vmatpush1.bf16.msra.mxu0 0
    %572 = vmatprep.subr.bf16.mxu0 0
    %573 = vmatpush1.bf16.msra.mxu0 0
    %574 = vmatprep.subr.bf16.mxu0 0
    %575 = vmatpush1.bf16.msra.mxu0 0
    %576 = vmatprep.subr.bf16.mxu0 0
    %577 = vmatpush1.bf16.msra.mxu0 0
    %578 = vmatprep.subr.bf16.mxu0 0
    %579 = vmatpush1.bf16.msra.mxu0 0
    %580 = vmatprep.subr.bf16.mxu0 0
    %581 = vmatpush1.bf16.msra.mxu0 0
    %582 = vmatprep.subr.bf16.mxu0 0
    %583 = vmatpush1.bf16.msra.mxu0 0
    %584 = vmatprep.subr.bf16.mxu0 0
    %585 = vmatpush1.bf16.msra.mxu0 0
    %586 = vmatprep.subr.bf16.mxu0 0
    %587 = vmatpush1.bf16.msra.mxu0 0
    %588 = vmatprep.subr.bf16.mxu0 0
    %589 = vmatpush1.bf16.msra.mxu0 0
    %590 = vmatprep.mubr.bf16.mxu0 0
    %591 = vmatmul.mubr.bf16.gmra.mrb[0].mxu0 %v547
    %v592 = vpop.f32.mrb[0].mxu0
    %v593 = vadd.f32 %v533, %v592
    %v594 = vpop.f32.mrb[0].mxu0
    %v595 = vpop.f32.mrb[0].mxu0
    %v596 = vadd.f32 %v533, %v595
    %v597 = vpop.f32.mrb[0].mxu0
    %598 = vmatprep.mubr.bf16.mxu0 0
    %599 = vmatmul.mubr.bf16.gmra.mrb[0].mxu0 %v550
    %v600 = vpop.f32.mrb[0].mxu0
    %v601 = vadd.f32 %v533, %v600
    %v602 = vpop.f32.mrb[0].mxu0
    %v603 = vpop.f32.mrb[0].mxu0
    %v604 = vadd.f32 %v533, %v603
    %v605 = vpop.f32.mrb[0].mxu0
    %606 = vmatprep.mubr.bf16.mxu0 0
    %607 = vmatmul.mubr.bf16.gmra.mrb[0].mxu0 %v553
    %v608 = vpop.f32.mrb[0].mxu0
    %v609 = vadd.f32 %v533, %v608
    %v610 = vpop.f32.mrb[0].mxu0
    %v611 = vpop.f32.mrb[0].mxu0
    %v612 = vadd.f32 %v533, %v611
    %v613 = vpop.f32.mrb[0].mxu0
    %614 = vmatprep.mubr.bf16.mxu0 0
    %615 = vmatmul.mubr.bf16.gmra.mrb[0].mxu0 %v556
    %v616 = vpop.f32.mrb[0].mxu0
    %v617 = vadd.f32 %v533, %v616
    %v618 = vpop.f32.mrb[0].mxu0
    %v619 = vpop.f32.mrb[0].mxu0
    %v620 = vadd.f32 %v533, %v619
    %v621 = vpop.f32.mrb[0].mxu0
    %622 = vdwg.mxu0
    %v623 = vsel %vm311, %v593, 0.0
    %624 = vadd.xlane.f32.xlu0 %v623
    %v625 = vpop.xlane.xlu0 %624
    %v626 = vsel %vm311, %v596, 0.0
    %627 = vadd.xlane.f32.xlu0 %v626
    %v628 = vpop.xlane.xlu0 %627
    %v629 = vsel %vm311, %v601, 0.0
    %630 = vadd.xlane.f32.xlu0 %v629
    %v631 = vpop.xlane.xlu0 %630
    %v632 = vsel %vm311, %v604, 0.0
    %633 = vadd.xlane.f32.xlu0 %v632
    %v634 = vpop.xlane.xlu0 %633
    %v635 = vsel %vm311, %v609, 0.0
    %636 = vadd.xlane.f32.xlu0 %v635
    %v637 = vpop.xlane.xlu0 %636
    %v638 = vsel %vm311, %v612, 0.0
    %639 = vadd.xlane.f32.xlu0 %v638
    %v640 = vpop.xlane.xlu0 %639
    %v641 = vsel %vm311, %v617, 0.0
    %642 = vadd.xlane.f32.xlu0 %v641
    %v643 = vpop.xlane.xlu0 %642
    %v644 = vsel %vm311, %v620, 0.0
    %645 = vadd.xlane.f32.xlu0 %v644
    %v646 = vpop.xlane.xlu0 %645
    %v647 = vmul.f32 %v625, %v413
    %v648 = vmul.f32 %v628, %v413
    %v649 = vmul.f32 %v631, %v413
    %v650 = vmul.f32 %v634, %v413
    %v651 = vmul.f32 %v637, %v413
    %v652 = vmul.f32 %v640, %v413
    %v653 = vmul.f32 %v643, %v413
    %v654 = vmul.f32 %v646, %v413
    %v655 = vsub.f32 %v593, %v647
    %v656 = vsub.f32 %v596, %v648
    %v657 = vsub.f32 %v601, %v649
    %v658 = vsub.f32 %v604, %v650
    %v659 = vsub.f32 %v609, %v651
    %v660 = vsub.f32 %v612, %v652
    %v661 = vsub.f32 %v617, %v653
    %v662 = vsub.f32 %v620, %v654
    %v663 = vmul.f32 %v655, %v655
    %v664 = vmul.f32 %v656, %v656
    %v665 = vmul.f32 %v657, %v657
    %v666 = vmul.f32 %v658, %v658
    %v667 = vmul.f32 %v659, %v659
    %v668 = vmul.f32 %v660, %v660
    %v669 = vmul.f32 %v661, %v661
    %v670 = vmul.f32 %v662, %v662
    %v671 = vsel %vm311, %v663, 0.0
    %672 = vadd.xlane.f32.xlu0 %v671
    %v673 = vpop.xlane.xlu0 %672
    %v674 = vsel %vm311, %v664, 0.0
    %675 = vadd.xlane.f32.xlu0 %v674
    %v676 = vpop.xlane.xlu0 %675
    %v677 = vsel %vm311, %v665, 0.0
    %678 = vadd.xlane.f32.xlu0 %v677
    %v679 = vpop.xlane.xlu0 %678
    %v680 = vsel %vm311, %v666, 0.0
    %681 = vadd.xlane.f32.xlu0 %v680
    %v682 = vpop.xlane.xlu0 %681
    %v683 = vsel %vm311, %v667, 0.0
    %684 = vadd.xlane.f32.xlu0 %v683
    %v685 = vpop.xlane.xlu0 %684
    %v686 = vsel %vm311, %v668, 0.0
    %687 = vadd.xlane.f32.xlu0 %v686
    %v688 = vpop.xlane.xlu0 %687
    %v689 = vsel %vm311, %v669, 0.0
    %690 = vadd.xlane.f32.xlu0 %v689
    %v691 = vpop.xlane.xlu0 %690
    %v692 = vsel %vm311, %v670, 0.0
    %693 = vadd.xlane.f32.xlu0 %v692
    %v694 = vpop.xlane.xlu0 %693
    %v695 = vmul.f32 %v673, %v413
    %v696 = vmul.f32 %v676, %v413
    %v697 = vmul.f32 %v679, %v413
    %v698 = vmul.f32 %v682, %v413
    %v699 = vmul.f32 %v685, %v413
    %v700 = vmul.f32 %v688, %v413
    %v701 = vmul.f32 %v691, %v413
    %v702 = vmul.f32 %v694, %v413
    %v703 = vadd.f32 %v695, 1e-05
    %v704 = vadd.f32 %v696, 1e-05
    %v705 = vadd.f32 %v697, 1e-05
    %v706 = vadd.f32 %v698, 1e-05
    %v707 = vadd.f32 %v699, 1e-05
    %v708 = vadd.f32 %v700, 1e-05
    %v709 = vadd.f32 %v701, 1e-05
    %v710 = vadd.f32 %v702, 1e-05
    %v711 = vrsqrt.pop %v703
    %v712 = vrsqrt.pop %v704
    %v713 = vrsqrt.pop %v705
    %v714 = vrsqrt.pop %v706
    %v715 = vrsqrt.pop %v707
    %v716 = vrsqrt.pop %v708
    %v717 = vrsqrt.pop %v709
    %v718 = vrsqrt.pop %v710
    %v719 = vmul.f32 %v655, %v711
    %v720 = vmul.f32 %v656, %v712
    %v721 = vmul.f32 %v657, %v713
    %v722 = vmul.f32 %v658, %v714
    %v723 = vmul.f32 %v659, %v715
    %v724 = vmul.f32 %v660, %v716
    %v725 = vmul.f32 %v661, %v717
    %v726 = vmul.f32 %v662, %v718
    %v727 = vlaneseq
    %v728 = vshrl.u32 %v727, 7
    %v729 = vsub.s32 5, %v728
    %v730 = vrot.slane %v78, %v729
    %v731 = vmul.f32 %v719, %v730
    %v732 = vmul.f32 %v720, %v730
    %v733 = vmul.f32 %v721, %v730
    %v734 = vmul.f32 %v722, %v730
    %v735 = vmul.f32 %v723, %v730
    %v736 = vmul.f32 %v724, %v730
    %v737 = vmul.f32 %v725, %v730
    %v738 = vmul.f32 %v726, %v730
    %v739 = vlaneseq
    %v740 = vshrl.u32 %v739, 7
    %v741 = vsub.s32 6, %v740
    %v742 = vrot.slane %v78, %v741
    %v743 = vadd.f32 %v731, %v742
    %v744 = vadd.f32 %v732, %v742
    %v745 = vadd.f32 %v733, %v742
    %v746 = vadd.f32 %v734, %v742
    %v747 = vadd.f32 %v735, %v742
    %v748 = vadd.f32 %v736, %v742
    %v749 = vadd.f32 %v737, %v742
    %v750 = vadd.f32 %v738, %v742
    %v751 = vmax.f32 %v743, 0.0
    %v752 = vmax.f32 %v744, 0.0
    %v753 = vmax.f32 %v745, 0.0
    %v754 = vmax.f32 %v746, 0.0
    %v755 = vmax.f32 %v747, 0.0
    %v756 = vmax.f32 %v748, 0.0
    %v757 = vmax.f32 %v749, 0.0
    %v758 = vmax.f32 %v750, 0.0
    %v759 = vpack.c.bf16 %v752, %v751
    %v760 = vpack.c.bf16 %v754, %v753
    %v761 = vpack.c.bf16 %v756, %v755
    %v762 = vpack.c.bf16 %v758, %v757
    %763 = vmatprep.subr.bf16.mxu0 0
    %764 = vmatpush1.bf16.msra.mxu0 %v759
    %765 = vmatprep.subr.bf16.mxu0 0
    %766 = vmatpush1.bf16.msra.mxu0 %v760
    %767 = vmatprep.subr.bf16.mxu0 0
    %768 = vmatpush1.bf16.msra.mxu0 %v761
    %769 = vmatprep.subr.bf16.mxu0 0
    %770 = vmatpush1.bf16.msra.mxu0 %v762
    %771 = vmatprep.subr.bf16.mxu0 0
    %772 = vmatpush1.bf16.msra.mxu0 0
    %773 = vmatprep.subr.bf16.mxu0 0
    %774 = vmatpush1.bf16.msra.mxu0 0
    %775 = vmatprep.subr.bf16.mxu0 0
    %776 = vmatpush1.bf16.msra.mxu0 0
    %777 = vmatprep.subr.bf16.mxu0 0
    %778 = vmatpush1.bf16.msra.mxu0 0
    %779 = vmatprep.subr.bf16.mxu0 0
    %780 = vmatpush1.bf16.msra.mxu0 0
    %781 = vmatprep.subr.bf16.mxu0 0
    %782 = vmatpush1.bf16.msra.mxu0 0
    %783 = vmatprep.subr.bf16.mxu0 0
    %784 = vmatpush1.bf16.msra.mxu0 0
    %785 = vmatprep.subr.bf16.mxu0 0
    %786 = vmatpush1.bf16.msra.mxu0 0
    %787 = vmatprep.subr.bf16.mxu0 0
    %788 = vmatpush1.bf16.msra.mxu0 0
    %789 = vmatprep.subr.bf16.mxu0 0
    %790 = vmatpush1.bf16.msra.mxu0 0
    %791 = vmatprep.subr.bf16.mxu0 0
    %792 = vmatpush1.bf16.msra.mxu0 0
    %793 = vmatprep.subr.bf16.mxu0 0
    %794 = vmatpush1.bf16.msra.mxu0 0
    %795 = vmatprep.mubr.bf16.mxu0 0
    %796 = vmatmul.mubr.bf16.gmra.mrb[0].mxu0 %v215
    %v797 = vpop.f32.mrb[0].mxu0
    %v798 = vadd.f32 0.0, %v797
    %v799 = vpop.f32.mrb[0].mxu0
    %v800 = vpop.f32.mrb[0].mxu0
    %v801 = vadd.f32 0.0, %v800
    %v802 = vpop.f32.mrb[0].mxu0
    %803 = vmatprep.mubr.bf16.mxu0 0
    %804 = vmatmul.mubr.bf16.gmra.mrb[0].mxu0 %v218
    %v805 = vpop.f32.mrb[0].mxu0
    %v806 = vadd.f32 0.0, %v805
    %v807 = vpop.f32.mrb[0].mxu0
    %v808 = vpop.f32.mrb[0].mxu0
    %v809 = vadd.f32 0.0, %v808
    %v810 = vpop.f32.mrb[0].mxu0
    %811 = vmatprep.mubr.bf16.mxu0 0
    %812 = vmatmul.mubr.bf16.gmra.mrb[0].mxu0 %v221
    %v813 = vpop.f32.mrb[0].mxu0
    %v814 = vadd.f32 0.0, %v813
    %v815 = vpop.f32.mrb[0].mxu0
    %v816 = vpop.f32.mrb[0].mxu0
    %v817 = vadd.f32 0.0, %v816
    %v818 = vpop.f32.mrb[0].mxu0
    %819 = vmatprep.mubr.bf16.mxu0 0
    %820 = vmatmul.mubr.bf16.gmra.mrb[0].mxu0 %v224
    %v821 = vpop.f32.mrb[0].mxu0
    %v822 = vadd.f32 0.0, %v821
    %v823 = vpop.f32.mrb[0].mxu0
    %v824 = vpop.f32.mrb[0].mxu0
    %v825 = vadd.f32 0.0, %v824
    %v826 = vpop.f32.mrb[0].mxu0
    %827 = vdwg.mxu0
    %v828 = vpack.c.bf16 %v801, %v798
    %v829 = vpack.c.bf16 %v809, %v806
    %v830 = vpack.c.bf16 %v817, %v814
    %v831 = vpack.c.bf16 %v825, %v822
    %v832 = vlaneseq
    %v833 = vshrl.u32 %v832, 7
    %v834 = vsub.s32 7, %v833
    %v835 = vrot.slane %v78, %v834
    %v840 = vunpack.c.l.b16 %v62
    %v841 = vunpack.c.l.b16 %v63
    %v842 = vunpack.c.l.b16 %v64
    %v843 = vunpack.c.l.b16 %v65
    %v844 = vpack.c.b16 %v841, %v840
    %v845 = vpack.c.b16 %v843, %v842
    %v849 = vsel %vm311, %v828, 0
    %v852 = vsel %vm311, %v829, 0
    %v855 = vsel %vm311, %v830, 0
    %v858 = vsel %vm311, %v831, 0
    %860 = vmatprep.subr.bf16.mxu0 0
    %861 = vmatpush1.bf16.msra.mxu0 %v844
    %862 = vmatprep.subr.bf16.mxu0 0
    %863 = vmatpush1.bf16.msra.mxu0 %v845
    %864 = vmatprep.subr.bf16.mxu0 0
    %865 = vmatpush1.bf16.msra.mxu0 0
    %866 = vmatprep.subr.bf16.mxu0 0
    %867 = vmatpush1.bf16.msra.mxu0 0
    %868 = vmatprep.subr.bf16.mxu0 0
    %869 = vmatpush1.bf16.msra.mxu0 0
    %870 = vmatprep.subr.bf16.mxu0 0
    %871 = vmatpush1.bf16.msra.mxu0 0
    %872 = vmatprep.subr.bf16.mxu0 0
    %873 = vmatpush1.bf16.msra.mxu0 0
    %874 = vmatprep.subr.bf16.mxu0 0
    %875 = vmatpush1.bf16.msra.mxu0 0
    %876 = vmatprep.subr.bf16.mxu0 0
    %877 = vmatpush1.bf16.msra.mxu0 0
    %878 = vmatprep.subr.bf16.mxu0 0
    %879 = vmatpush1.bf16.msra.mxu0 0
    %880 = vmatprep.subr.bf16.mxu0 0
    %881 = vmatpush1.bf16.msra.mxu0 0
    %882 = vmatprep.subr.bf16.mxu0 0
    %883 = vmatpush1.bf16.msra.mxu0 0
    %884 = vmatprep.subr.bf16.mxu0 0
    %885 = vmatpush1.bf16.msra.mxu0 0
    %886 = vmatprep.subr.bf16.mxu0 0
    %887 = vmatpush1.bf16.msra.mxu0 0
    %888 = vmatprep.subr.bf16.mxu0 0
    %889 = vmatpush1.bf16.msra.mxu0 0
    %890 = vmatprep.subr.bf16.mxu0 0
    %891 = vmatpush1.bf16.msra.mxu0 0
    %892 = vmatprep.mubr.bf16.mxu0 0
    %893 = vmatmul.mubr.bf16.gmra.mrb[0].mxu0 %v849
    %v894 = vpop.f32.mrb[0].mxu0
    %v895 = vadd.f32 %v835, %v894
    %v896 = vpop.f32.mrb[0].mxu0
    %v897 = vpop.f32.mrb[0].mxu0
    %v898 = vadd.f32 %v835, %v897
    %v899 = vpop.f32.mrb[0].mxu0
    %900 = vmatprep.mubr.bf16.mxu0 0
    %901 = vmatmul.mubr.bf16.gmra.mrb[0].mxu0 %v852
    %v902 = vpop.f32.mrb[0].mxu0
    %v903 = vadd.f32 %v835, %v902
    %v904 = vpop.f32.mrb[0].mxu0
    %v905 = vpop.f32.mrb[0].mxu0
    %v906 = vadd.f32 %v835, %v905
    %v907 = vpop.f32.mrb[0].mxu0
    %908 = vmatprep.mubr.bf16.mxu0 0
    %909 = vmatmul.mubr.bf16.gmra.mrb[0].mxu0 %v855
    %v910 = vpop.f32.mrb[0].mxu0
    %v911 = vadd.f32 %v835, %v910
    %v912 = vpop.f32.mrb[0].mxu0
    %v913 = vpop.f32.mrb[0].mxu0
    %v914 = vadd.f32 %v835, %v913
    %v915 = vpop.f32.mrb[0].mxu0
    %916 = vmatprep.mubr.bf16.mxu0 0
    %917 = vmatmul.mubr.bf16.gmra.mrb[0].mxu0 %v858
    %v918 = vpop.f32.mrb[0].mxu0
    %v919 = vadd.f32 %v835, %v918
    %v920 = vpop.f32.mrb[0].mxu0
    %v921 = vpop.f32.mrb[0].mxu0
    %v922 = vadd.f32 %v835, %v921
    %v923 = vpop.f32.mrb[0].mxu0
    %924 = vdwg.mxu0
    %v925 = vsel %vm311, %v895, 0.0
    %926 = vadd.xlane.f32.xlu0 %v925
    %v927 = vpop.xlane.xlu0 %926
    %v928 = vsel %vm311, %v898, 0.0
    %929 = vadd.xlane.f32.xlu0 %v928
    %v930 = vpop.xlane.xlu0 %929
    %v931 = vsel %vm311, %v903, 0.0
    %932 = vadd.xlane.f32.xlu0 %v931
    %v933 = vpop.xlane.xlu0 %932
    %v934 = vsel %vm311, %v906, 0.0
    %935 = vadd.xlane.f32.xlu0 %v934
    %v936 = vpop.xlane.xlu0 %935
    %v937 = vsel %vm311, %v911, 0.0
    %938 = vadd.xlane.f32.xlu0 %v937
    %v939 = vpop.xlane.xlu0 %938
    %v940 = vsel %vm311, %v914, 0.0
    %941 = vadd.xlane.f32.xlu0 %v940
    %v942 = vpop.xlane.xlu0 %941
    %v943 = vsel %vm311, %v919, 0.0
    %944 = vadd.xlane.f32.xlu0 %v943
    %v945 = vpop.xlane.xlu0 %944
    %v946 = vsel %vm311, %v922, 0.0
    %947 = vadd.xlane.f32.xlu0 %v946
    %v948 = vpop.xlane.xlu0 %947
    %v949 = vmul.f32 %v927, %v413
    %v950 = vmul.f32 %v930, %v413
    %v951 = vmul.f32 %v933, %v413
    %v952 = vmul.f32 %v936, %v413
    %v953 = vmul.f32 %v939, %v413
    %v954 = vmul.f32 %v942, %v413
    %v955 = vmul.f32 %v945, %v413
    %v956 = vmul.f32 %v948, %v413
    %v957 = vsub.f32 %v895, %v949
    %v958 = vsub.f32 %v898, %v950
    %v959 = vsub.f32 %v903, %v951
    %v960 = vsub.f32 %v906, %v952
    %v961 = vsub.f32 %v911, %v953
    %v962 = vsub.f32 %v914, %v954
    %v963 = vsub.f32 %v919, %v955
    %v964 = vsub.f32 %v922, %v956
    %v965 = vmul.f32 %v957, %v957
    %v966 = vmul.f32 %v958, %v958
    %v967 = vmul.f32 %v959, %v959
    %v968 = vmul.f32 %v960, %v960
    %v969 = vmul.f32 %v961, %v961
    %v970 = vmul.f32 %v962, %v962
    %v971 = vmul.f32 %v963, %v963
    %v972 = vmul.f32 %v964, %v964
    %v973 = vsel %vm311, %v965, 0.0
    %974 = vadd.xlane.f32.xlu0 %v973
    %v975 = vpop.xlane.xlu0 %974
    %v976 = vsel %vm311, %v966, 0.0
    %977 = vadd.xlane.f32.xlu0 %v976
    %v978 = vpop.xlane.xlu0 %977
    %v979 = vsel %vm311, %v967, 0.0
    %980 = vadd.xlane.f32.xlu0 %v979
    %v981 = vpop.xlane.xlu0 %980
    %v982 = vsel %vm311, %v968, 0.0
    %983 = vadd.xlane.f32.xlu0 %v982
    %v984 = vpop.xlane.xlu0 %983
    %v985 = vsel %vm311, %v969, 0.0
    %986 = vadd.xlane.f32.xlu0 %v985
    %v987 = vpop.xlane.xlu0 %986
    %v988 = vsel %vm311, %v970, 0.0
    %989 = vadd.xlane.f32.xlu0 %v988
    %v990 = vpop.xlane.xlu0 %989
    %v991 = vsel %vm311, %v971, 0.0
    %992 = vadd.xlane.f32.xlu0 %v991
    %v993 = vpop.xlane.xlu0 %992
    %v994 = vsel %vm311, %v972, 0.0
    %995 = vadd.xlane.f32.xlu0 %v994
    %v996 = vpop.xlane.xlu0 %995
    %v997 = vmul.f32 %v975, %v413
    %v998 = vmul.f32 %v978, %v413
    %v999 = vmul.f32 %v981, %v413
    %v1000 = vmul.f32 %v984, %v413
    %v1001 = vmul.f32 %v987, %v413
    %v1002 = vmul.f32 %v990, %v413
    %v1003 = vmul.f32 %v993, %v413
    %v1004 = vmul.f32 %v996, %v413
    %v1005 = vadd.f32 %v997, 1e-05
    %v1006 = vadd.f32 %v998, 1e-05
    %v1007 = vadd.f32 %v999, 1e-05
    %v1008 = vadd.f32 %v1000, 1e-05
    %v1009 = vadd.f32 %v1001, 1e-05
    %v1010 = vadd.f32 %v1002, 1e-05
    %v1011 = vadd.f32 %v1003, 1e-05
    %v1012 = vadd.f32 %v1004, 1e-05
    %v1013 = vrsqrt.pop %v1005
    %v1014 = vrsqrt.pop %v1006
    %v1015 = vrsqrt.pop %v1007
    %v1016 = vrsqrt.pop %v1008
    %v1017 = vrsqrt.pop %v1009
    %v1018 = vrsqrt.pop %v1010
    %v1019 = vrsqrt.pop %v1011
    %v1020 = vrsqrt.pop %v1012
    %v1021 = vmul.f32 %v957, %v1013
    %v1022 = vmul.f32 %v958, %v1014
    %v1023 = vmul.f32 %v959, %v1015
    %v1024 = vmul.f32 %v960, %v1016
    %v1025 = vmul.f32 %v961, %v1017
    %v1026 = vmul.f32 %v962, %v1018
    %v1027 = vmul.f32 %v963, %v1019
    %v1028 = vmul.f32 %v964, %v1020
    %v1029 = vlaneseq
    %v1030 = vshrl.u32 %v1029, 7
    %v1031 = vsub.s32 0, %v1030
    %v1032 = vrot.slane %v79, %v1031
    %v1033 = vmul.f32 %v1021, %v1032
    %v1034 = vmul.f32 %v1022, %v1032
    %v1035 = vmul.f32 %v1023, %v1032
    %v1036 = vmul.f32 %v1024, %v1032
    %v1037 = vmul.f32 %v1025, %v1032
    %v1038 = vmul.f32 %v1026, %v1032
    %v1039 = vmul.f32 %v1027, %v1032
    %v1040 = vmul.f32 %v1028, %v1032
    %v1041 = vlaneseq
    %v1042 = vshrl.u32 %v1041, 7
    %v1043 = vsub.s32 1, %v1042
    %v1044 = vrot.slane %v79, %v1043
    %v1045 = vadd.f32 %v1033, %v1044
    %v1046 = vadd.f32 %v1034, %v1044
    %v1047 = vadd.f32 %v1035, %v1044
    %v1048 = vadd.f32 %v1036, %v1044
    %v1049 = vadd.f32 %v1037, %v1044
    %v1050 = vadd.f32 %v1038, %v1044
    %v1051 = vadd.f32 %v1039, %v1044
    %v1052 = vadd.f32 %v1040, %v1044
    %v1053 = vmax.f32 %v1045, 0.0
    %v1054 = vmax.f32 %v1046, 0.0
    %v1055 = vmax.f32 %v1047, 0.0
    %v1056 = vmax.f32 %v1048, 0.0
    %v1057 = vmax.f32 %v1049, 0.0
    %v1058 = vmax.f32 %v1050, 0.0
    %v1059 = vmax.f32 %v1051, 0.0
    %v1060 = vmax.f32 %v1052, 0.0
    %v1061 = vpack.c.bf16 %v1054, %v1053
    %v1062 = vpack.c.bf16 %v1056, %v1055
    %v1063 = vpack.c.bf16 %v1058, %v1057
    %v1064 = vpack.c.bf16 %v1060, %v1059
    %v1065 = vlaneseq
    %v1066 = vshrl.u32 %v1065, 7
    %v1067 = vsub.s32 2, %v1066
    %v1068 = vrot.slane %v79, %v1067
    %v1073 = vunpack.c.l.b16 %v66
    %v1074 = vunpack.c.l.b16 %v67
    %v1075 = vunpack.c.l.b16 %v68
    %v1076 = vunpack.c.l.b16 %v69
    %v1077 = vpack.c.b16 %v1074, %v1073
    %v1078 = vpack.c.b16 %v1076, %v1075
    %v1082 = vsel %vm311, %v1061, 0
    %v1085 = vsel %vm311, %v1062, 0
    %v1088 = vsel %vm311, %v1063, 0
    %v1091 = vsel %vm311, %v1064, 0
    %1093 = vmatprep.subr.bf16.mxu0 0
    %1094 = vmatpush1.bf16.msra.mxu0 %v1077
    %1095 = vmatprep.subr.bf16.mxu0 0
    %1096 = vmatpush1.bf16.msra.mxu0 %v1078
    %1097 = vmatprep.subr.bf16.mxu0 0
    %1098 = vmatpush1.bf16.msra.mxu0 0
    %1099 = vmatprep.subr.bf16.mxu0 0
    %1100 = vmatpush1.bf16.msra.mxu0 0
    %1101 = vmatprep.subr.bf16.mxu0 0
    %1102 = vmatpush1.bf16.msra.mxu0 0
    %1103 = vmatprep.subr.bf16.mxu0 0
    %1104 = vmatpush1.bf16.msra.mxu0 0
    %1105 = vmatprep.subr.bf16.mxu0 0
    %1106 = vmatpush1.bf16.msra.mxu0 0
    %1107 = vmatprep.subr.bf16.mxu0 0
    %1108 = vmatpush1.bf16.msra.mxu0 0
    %1109 = vmatprep.subr.bf16.mxu0 0
    %1110 = vmatpush1.bf16.msra.mxu0 0
    %1111 = vmatprep.subr.bf16.mxu0 0
    %1112 = vmatpush1.bf16.msra.mxu0 0
    %1113 = vmatprep.subr.bf16.mxu0 0
    %1114 = vmatpush1.bf16.msra.mxu0 0
    %1115 = vmatprep.subr.bf16.mxu0 0
    %1116 = vmatpush1.bf16.msra.mxu0 0
    %1117 = vmatprep.subr.bf16.mxu0 0
    %1118 = vmatpush1.bf16.msra.mxu0 0
    %1119 = vmatprep.subr.bf16.mxu0 0
    %1120 = vmatpush1.bf16.msra.mxu0 0
    %1121 = vmatprep.subr.bf16.mxu0 0
    %1122 = vmatpush1.bf16.msra.mxu0 0
    %1123 = vmatprep.subr.bf16.mxu0 0
    %1124 = vmatpush1.bf16.msra.mxu0 0
    %1125 = vmatprep.mubr.bf16.mxu0 0
    %1126 = vmatmul.mubr.bf16.gmra.mrb[0].mxu0 %v1082
    %v1127 = vpop.f32.mrb[0].mxu0
    %v1128 = vadd.f32 %v1068, %v1127
    %v1129 = vpop.f32.mrb[0].mxu0
    %v1130 = vpop.f32.mrb[0].mxu0
    %v1131 = vadd.f32 %v1068, %v1130
    %v1132 = vpop.f32.mrb[0].mxu0
    %1133 = vmatprep.mubr.bf16.mxu0 0
    %1134 = vmatmul.mubr.bf16.gmra.mrb[0].mxu0 %v1085
    %v1135 = vpop.f32.mrb[0].mxu0
    %v1136 = vadd.f32 %v1068, %v1135
    %v1137 = vpop.f32.mrb[0].mxu0
    %v1138 = vpop.f32.mrb[0].mxu0
    %v1139 = vadd.f32 %v1068, %v1138
    %v1140 = vpop.f32.mrb[0].mxu0
    %1141 = vmatprep.mubr.bf16.mxu0 0
    %1142 = vmatmul.mubr.bf16.gmra.mrb[0].mxu0 %v1088
    %v1143 = vpop.f32.mrb[0].mxu0
    %v1144 = vadd.f32 %v1068, %v1143
    %v1145 = vpop.f32.mrb[0].mxu0
    %v1146 = vpop.f32.mrb[0].mxu0
    %v1147 = vadd.f32 %v1068, %v1146
    %v1148 = vpop.f32.mrb[0].mxu0
    %1149 = vmatprep.mubr.bf16.mxu0 0
    %1150 = vmatmul.mubr.bf16.gmra.mrb[0].mxu0 %v1091
    %v1151 = vpop.f32.mrb[0].mxu0
    %v1152 = vadd.f32 %v1068, %v1151
    %v1153 = vpop.f32.mrb[0].mxu0
    %v1154 = vpop.f32.mrb[0].mxu0
    %v1155 = vadd.f32 %v1068, %v1154
    %v1156 = vpop.f32.mrb[0].mxu0
    %1157 = vdwg.mxu0
    %v1158 = vsel %vm311, %v1128, 0.0
    %1159 = vadd.xlane.f32.xlu0 %v1158
    %v1160 = vpop.xlane.xlu0 %1159
    %v1161 = vsel %vm311, %v1131, 0.0
    %1162 = vadd.xlane.f32.xlu0 %v1161
    %v1163 = vpop.xlane.xlu0 %1162
    %v1164 = vsel %vm311, %v1136, 0.0
    %1165 = vadd.xlane.f32.xlu0 %v1164
    %v1166 = vpop.xlane.xlu0 %1165
    %v1167 = vsel %vm311, %v1139, 0.0
    %1168 = vadd.xlane.f32.xlu0 %v1167
    %v1169 = vpop.xlane.xlu0 %1168
    %v1170 = vsel %vm311, %v1144, 0.0
    %1171 = vadd.xlane.f32.xlu0 %v1170
    %v1172 = vpop.xlane.xlu0 %1171
    %v1173 = vsel %vm311, %v1147, 0.0
    %1174 = vadd.xlane.f32.xlu0 %v1173
    %v1175 = vpop.xlane.xlu0 %1174
    %v1176 = vsel %vm311, %v1152, 0.0
    %1177 = vadd.xlane.f32.xlu0 %v1176
    %v1178 = vpop.xlane.xlu0 %1177
    %v1179 = vsel %vm311, %v1155, 0.0
    %1180 = vadd.xlane.f32.xlu0 %v1179
    %v1181 = vpop.xlane.xlu0 %1180
    %v1182 = vmul.f32 %v1160, %v413
    %v1183 = vmul.f32 %v1163, %v413
    %v1184 = vmul.f32 %v1166, %v413
    %v1185 = vmul.f32 %v1169, %v413
    %v1186 = vmul.f32 %v1172, %v413
    %v1187 = vmul.f32 %v1175, %v413
    %v1188 = vmul.f32 %v1178, %v413
    %v1189 = vmul.f32 %v1181, %v413
    %v1190 = vsub.f32 %v1128, %v1182
    %v1191 = vsub.f32 %v1131, %v1183
    %v1192 = vsub.f32 %v1136, %v1184
    %v1193 = vsub.f32 %v1139, %v1185
    %v1194 = vsub.f32 %v1144, %v1186
    %v1195 = vsub.f32 %v1147, %v1187
    %v1196 = vsub.f32 %v1152, %v1188
    %v1197 = vsub.f32 %v1155, %v1189
    %v1198 = vmul.f32 %v1190, %v1190
    %v1199 = vmul.f32 %v1191, %v1191
    %v1200 = vmul.f32 %v1192, %v1192
    %v1201 = vmul.f32 %v1193, %v1193
    %v1202 = vmul.f32 %v1194, %v1194
    %v1203 = vmul.f32 %v1195, %v1195
    %v1204 = vmul.f32 %v1196, %v1196
    %v1205 = vmul.f32 %v1197, %v1197
    %v1206 = vsel %vm311, %v1198, 0.0
    %1207 = vadd.xlane.f32.xlu0 %v1206
    %v1208 = vpop.xlane.xlu0 %1207
    %v1209 = vsel %vm311, %v1199, 0.0
    %1210 = vadd.xlane.f32.xlu0 %v1209
    %v1211 = vpop.xlane.xlu0 %1210
    %v1212 = vsel %vm311, %v1200, 0.0
    %1213 = vadd.xlane.f32.xlu0 %v1212
    %v1214 = vpop.xlane.xlu0 %1213
    %v1215 = vsel %vm311, %v1201, 0.0
    %1216 = vadd.xlane.f32.xlu0 %v1215
    %v1217 = vpop.xlane.xlu0 %1216
    %v1218 = vsel %vm311, %v1202, 0.0
    %1219 = vadd.xlane.f32.xlu0 %v1218
    %v1220 = vpop.xlane.xlu0 %1219
    %v1221 = vsel %vm311, %v1203, 0.0
    %1222 = vadd.xlane.f32.xlu0 %v1221
    %v1223 = vpop.xlane.xlu0 %1222
    %v1224 = vsel %vm311, %v1204, 0.0
    %1225 = vadd.xlane.f32.xlu0 %v1224
    %v1226 = vpop.xlane.xlu0 %1225
    %v1227 = vsel %vm311, %v1205, 0.0
    %1228 = vadd.xlane.f32.xlu0 %v1227
    %v1229 = vpop.xlane.xlu0 %1228
    %v1230 = vmul.f32 %v1208, %v413
    %v1231 = vmul.f32 %v1211, %v413
    %v1232 = vmul.f32 %v1214, %v413
    %v1233 = vmul.f32 %v1217, %v413
    %v1234 = vmul.f32 %v1220, %v413
    %v1235 = vmul.f32 %v1223, %v413
    %v1236 = vmul.f32 %v1226, %v413
    %v1237 = vmul.f32 %v1229, %v413
    %v1238 = vadd.f32 %v1230, 1e-05
    %v1239 = vadd.f32 %v1231, 1e-05
    %v1240 = vadd.f32 %v1232, 1e-05
    %v1241 = vadd.f32 %v1233, 1e-05
    %v1242 = vadd.f32 %v1234, 1e-05
    %v1243 = vadd.f32 %v1235, 1e-05
    %v1244 = vadd.f32 %v1236, 1e-05
    %v1245 = vadd.f32 %v1237, 1e-05
    %v1246 = vrsqrt.pop %v1238
    %v1247 = vrsqrt.pop %v1239
    %v1248 = vrsqrt.pop %v1240
    %v1249 = vrsqrt.pop %v1241
    %v1250 = vrsqrt.pop %v1242
    %v1251 = vrsqrt.pop %v1243
    %v1252 = vrsqrt.pop %v1244
    %v1253 = vrsqrt.pop %v1245
    %v1254 = vmul.f32 %v1190, %v1246
    %v1255 = vmul.f32 %v1191, %v1247
    %v1256 = vmul.f32 %v1192, %v1248
    %v1257 = vmul.f32 %v1193, %v1249
    %v1258 = vmul.f32 %v1194, %v1250
    %v1259 = vmul.f32 %v1195, %v1251
    %v1260 = vmul.f32 %v1196, %v1252
    %v1261 = vmul.f32 %v1197, %v1253
    %v1262 = vlaneseq
    %v1263 = vshrl.u32 %v1262, 7
    %v1264 = vsub.s32 3, %v1263
    %v1265 = vrot.slane %v79, %v1264
    %v1266 = vmul.f32 %v1254, %v1265
    %v1267 = vmul.f32 %v1255, %v1265
    %v1268 = vmul.f32 %v1256, %v1265
    %v1269 = vmul.f32 %v1257, %v1265
    %v1270 = vmul.f32 %v1258, %v1265
    %v1271 = vmul.f32 %v1259, %v1265
    %v1272 = vmul.f32 %v1260, %v1265
    %v1273 = vmul.f32 %v1261, %v1265
    %v1274 = vlaneseq
    %v1275 = vshrl.u32 %v1274, 7
    %v1276 = vsub.s32 4, %v1275
    %v1277 = vrot.slane %v79, %v1276
    %v1278 = vadd.f32 %v1266, %v1277
    %v1279 = vadd.f32 %v1267, %v1277
    %v1280 = vadd.f32 %v1268, %v1277
    %v1281 = vadd.f32 %v1269, %v1277
    %v1282 = vadd.f32 %v1270, %v1277
    %v1283 = vadd.f32 %v1271, %v1277
    %v1284 = vadd.f32 %v1272, %v1277
    %v1285 = vadd.f32 %v1273, %v1277
    %v1286 = vmax.f32 %v1278, 0.0
    %v1287 = vmax.f32 %v1279, 0.0
    %v1288 = vmax.f32 %v1280, 0.0
    %v1289 = vmax.f32 %v1281, 0.0
    %v1290 = vmax.f32 %v1282, 0.0
    %v1291 = vmax.f32 %v1283, 0.0
    %v1292 = vmax.f32 %v1284, 0.0
    %v1293 = vmax.f32 %v1285, 0.0
    %v1294 = vmul.f32 %v1286, %v84
    %v1295 = vmul.f32 %v1287, %v89
    %v1296 = vmul.f32 %v1288, %v94
    %v1297 = vmul.f32 %v1289, %v99
    %v1298 = vmul.f32 %v1290, %v104
    %v1299 = vmul.f32 %v1291, %v109
    %v1300 = vmul.f32 %v1292, %v114
    %v1301 = vmul.f32 %v1293, %v119
    %v1302 = vpack.c.bf16 %v1295, %v1294
    %v1303 = vpack.c.bf16 %v1297, %v1296
    %v1304 = vpack.c.bf16 %v1299, %v1298
    %v1305 = vpack.c.bf16 %v1301, %v1300
    %1306 = vmatprep.subr.bf16.mxu0 0
    %1307 = vmatpush1.bf16.msra.mxu0 %v1302
    %1308 = vmatprep.subr.bf16.mxu0 0
    %1309 = vmatpush1.bf16.msra.mxu0 %v1303
    %1310 = vmatprep.subr.bf16.mxu0 0
    %1311 = vmatpush1.bf16.msra.mxu0 %v1304
    %1312 = vmatprep.subr.bf16.mxu0 0
    %1313 = vmatpush1.bf16.msra.mxu0 %v1305
    %1314 = vmatprep.subr.bf16.mxu0 0
    %1315 = vmatpush1.bf16.msra.mxu0 0
    %1316 = vmatprep.subr.bf16.mxu0 0
    %1317 = vmatpush1.bf16.msra.mxu0 0
    %1318 = vmatprep.subr.bf16.mxu0 0
    %1319 = vmatpush1.bf16.msra.mxu0 0
    %1320 = vmatprep.subr.bf16.mxu0 0
    %1321 = vmatpush1.bf16.msra.mxu0 0
    %1322 = vmatprep.subr.bf16.mxu0 0
    %1323 = vmatpush1.bf16.msra.mxu0 0
    %1324 = vmatprep.subr.bf16.mxu0 0
    %1325 = vmatpush1.bf16.msra.mxu0 0
    %1326 = vmatprep.subr.bf16.mxu0 0
    %1327 = vmatpush1.bf16.msra.mxu0 0
    %1328 = vmatprep.subr.bf16.mxu0 0
    %1329 = vmatpush1.bf16.msra.mxu0 0
    %1330 = vmatprep.subr.bf16.mxu0 0
    %1331 = vmatpush1.bf16.msra.mxu0 0
    %1332 = vmatprep.subr.bf16.mxu0 0
    %1333 = vmatpush1.bf16.msra.mxu0 0
    %1334 = vmatprep.subr.bf16.mxu0 0
    %1335 = vmatpush1.bf16.msra.mxu0 0
    %1336 = vmatprep.subr.bf16.mxu0 0
    %1337 = vmatpush1.bf16.msra.mxu0 0
    %1338 = vmatprep.mubr.bf16.mxu0 0
    %1339 = vmatmul.mubr.bf16.gmra.mrb[0].mxu0 %v215
    %v1340 = vpop.f32.mrb[0].mxu0
    %v1341 = vadd.f32 0.0, %v1340
    %v1342 = vpop.f32.mrb[0].mxu0
    %v1343 = vpop.f32.mrb[0].mxu0
    %v1344 = vadd.f32 0.0, %v1343
    %v1345 = vpop.f32.mrb[0].mxu0
    %1346 = vmatprep.mubr.bf16.mxu0 0
    %1347 = vmatmul.mubr.bf16.gmra.mrb[0].mxu0 %v218
    %v1348 = vpop.f32.mrb[0].mxu0
    %v1349 = vadd.f32 0.0, %v1348
    %v1350 = vpop.f32.mrb[0].mxu0
    %v1351 = vpop.f32.mrb[0].mxu0
    %v1352 = vadd.f32 0.0, %v1351
    %v1353 = vpop.f32.mrb[0].mxu0
    %1354 = vmatprep.mubr.bf16.mxu0 0
    %1355 = vmatmul.mubr.bf16.gmra.mrb[0].mxu0 %v221
    %v1356 = vpop.f32.mrb[0].mxu0
    %v1357 = vadd.f32 0.0, %v1356
    %v1358 = vpop.f32.mrb[0].mxu0
    %v1359 = vpop.f32.mrb[0].mxu0
    %v1360 = vadd.f32 0.0, %v1359
    %v1361 = vpop.f32.mrb[0].mxu0
    %1362 = vmatprep.mubr.bf16.mxu0 0
    %1363 = vmatmul.mubr.bf16.gmra.mrb[0].mxu0 %v224
    %v1364 = vpop.f32.mrb[0].mxu0
    %v1365 = vadd.f32 0.0, %v1364
    %v1366 = vpop.f32.mrb[0].mxu0
    %v1367 = vpop.f32.mrb[0].mxu0
    %v1368 = vadd.f32 0.0, %v1367
    %v1369 = vpop.f32.mrb[0].mxu0
    %1370 = vdwg.mxu0
    %v1371 = vpack.c.bf16 %v1344, %v1341
    %v1372 = vpack.c.bf16 %v1352, %v1349
    %v1373 = vpack.c.bf16 %v1360, %v1357
    %v1374 = vpack.c.bf16 %v1368, %v1365
    %v1375 = vlaneseq
    %v1376 = vshrl.u32 %v1375, 7
    %v1377 = vsub.s32 5, %v1376
    %v1378 = vrot.slane %v79, %v1377
    %v1383 = vunpack.c.l.b16 %v70
    %v1384 = vunpack.c.l.b16 %v71
    %v1385 = vunpack.c.l.b16 %v72
    %v1386 = vunpack.c.l.b16 %v73
    %v1387 = vpack.c.b16 %v1384, %v1383
    %v1388 = vpack.c.b16 %v1386, %v1385
    %v1392 = vsel %vm311, %v1371, 0
    %v1395 = vsel %vm311, %v1372, 0
    %v1398 = vsel %vm311, %v1373, 0
    %v1401 = vsel %vm311, %v1374, 0
    %1403 = vmatprep.subr.bf16.mxu0 0
    %1404 = vmatpush1.bf16.msra.mxu0 %v1387
    %1405 = vmatprep.subr.bf16.mxu0 0
    %1406 = vmatpush1.bf16.msra.mxu0 %v1388
    %1407 = vmatprep.subr.bf16.mxu0 0
    %1408 = vmatpush1.bf16.msra.mxu0 0
    %1409 = vmatprep.subr.bf16.mxu0 0
    %1410 = vmatpush1.bf16.msra.mxu0 0
    %1411 = vmatprep.subr.bf16.mxu0 0
    %1412 = vmatpush1.bf16.msra.mxu0 0
    %1413 = vmatprep.subr.bf16.mxu0 0
    %1414 = vmatpush1.bf16.msra.mxu0 0
    %1415 = vmatprep.subr.bf16.mxu0 0
    %1416 = vmatpush1.bf16.msra.mxu0 0
    %1417 = vmatprep.subr.bf16.mxu0 0
    %1418 = vmatpush1.bf16.msra.mxu0 0
    %1419 = vmatprep.subr.bf16.mxu0 0
    %1420 = vmatpush1.bf16.msra.mxu0 0
    %1421 = vmatprep.subr.bf16.mxu0 0
    %1422 = vmatpush1.bf16.msra.mxu0 0
    %1423 = vmatprep.subr.bf16.mxu0 0
    %1424 = vmatpush1.bf16.msra.mxu0 0
    %1425 = vmatprep.subr.bf16.mxu0 0
    %1426 = vmatpush1.bf16.msra.mxu0 0
    %1427 = vmatprep.subr.bf16.mxu0 0
    %1428 = vmatpush1.bf16.msra.mxu0 0
    %1429 = vmatprep.subr.bf16.mxu0 0
    %1430 = vmatpush1.bf16.msra.mxu0 0
    %1431 = vmatprep.subr.bf16.mxu0 0
    %1432 = vmatpush1.bf16.msra.mxu0 0
    %1433 = vmatprep.subr.bf16.mxu0 0
    %1434 = vmatpush1.bf16.msra.mxu0 0
    %1435 = vmatprep.mubr.bf16.mxu0 0
    %1436 = vmatmul.mubr.bf16.gmra.mrb[0].mxu0 %v1392
    %v1437 = vpop.f32.mrb[0].mxu0
    %v1438 = vadd.f32 %v1378, %v1437
    %v1439 = vpop.f32.mrb[0].mxu0
    %v1440 = vpop.f32.mrb[0].mxu0
    %v1441 = vadd.f32 %v1378, %v1440
    %v1442 = vpop.f32.mrb[0].mxu0
    %1443 = vmatprep.mubr.bf16.mxu0 0
    %1444 = vmatmul.mubr.bf16.gmra.mrb[0].mxu0 %v1395
    %v1445 = vpop.f32.mrb[0].mxu0
    %v1446 = vadd.f32 %v1378, %v1445
    %v1447 = vpop.f32.mrb[0].mxu0
    %v1448 = vpop.f32.mrb[0].mxu0
    %v1449 = vadd.f32 %v1378, %v1448
    %v1450 = vpop.f32.mrb[0].mxu0
    %1451 = vmatprep.mubr.bf16.mxu0 0
    %1452 = vmatmul.mubr.bf16.gmra.mrb[0].mxu0 %v1398
    %v1453 = vpop.f32.mrb[0].mxu0
    %v1454 = vadd.f32 %v1378, %v1453
    %v1455 = vpop.f32.mrb[0].mxu0
    %v1456 = vpop.f32.mrb[0].mxu0
    %v1457 = vadd.f32 %v1378, %v1456
    %v1458 = vpop.f32.mrb[0].mxu0
    %1459 = vmatprep.mubr.bf16.mxu0 0
    %1460 = vmatmul.mubr.bf16.gmra.mrb[0].mxu0 %v1401
    %v1461 = vpop.f32.mrb[0].mxu0
    %v1462 = vadd.f32 %v1378, %v1461
    %v1463 = vpop.f32.mrb[0].mxu0
    %v1464 = vpop.f32.mrb[0].mxu0
    %v1465 = vadd.f32 %v1378, %v1464
    %v1466 = vpop.f32.mrb[0].mxu0
    %1467 = vdwg.mxu0
    %v1468 = vsel %vm311, %v1438, 0.0
    %1469 = vadd.xlane.f32.xlu0 %v1468
    %v1470 = vpop.xlane.xlu0 %1469
    %v1471 = vsel %vm311, %v1441, 0.0
    %1472 = vadd.xlane.f32.xlu0 %v1471
    %v1473 = vpop.xlane.xlu0 %1472
    %v1474 = vsel %vm311, %v1446, 0.0
    %1475 = vadd.xlane.f32.xlu0 %v1474
    %v1476 = vpop.xlane.xlu0 %1475
    %v1477 = vsel %vm311, %v1449, 0.0
    %1478 = vadd.xlane.f32.xlu0 %v1477
    %v1479 = vpop.xlane.xlu0 %1478
    %v1480 = vsel %vm311, %v1454, 0.0
    %1481 = vadd.xlane.f32.xlu0 %v1480
    %v1482 = vpop.xlane.xlu0 %1481
    %v1483 = vsel %vm311, %v1457, 0.0
    %1484 = vadd.xlane.f32.xlu0 %v1483
    %v1485 = vpop.xlane.xlu0 %1484
    %v1486 = vsel %vm311, %v1462, 0.0
    %1487 = vadd.xlane.f32.xlu0 %v1486
    %v1488 = vpop.xlane.xlu0 %1487
    %v1489 = vsel %vm311, %v1465, 0.0
    %1490 = vadd.xlane.f32.xlu0 %v1489
    %v1491 = vpop.xlane.xlu0 %1490
    %v1492 = vmul.f32 %v1470, %v413
    %v1493 = vmul.f32 %v1473, %v413
    %v1494 = vmul.f32 %v1476, %v413
    %v1495 = vmul.f32 %v1479, %v413
    %v1496 = vmul.f32 %v1482, %v413
    %v1497 = vmul.f32 %v1485, %v413
    %v1498 = vmul.f32 %v1488, %v413
    %v1499 = vmul.f32 %v1491, %v413
    %v1500 = vsub.f32 %v1438, %v1492
    %v1501 = vsub.f32 %v1441, %v1493
    %v1502 = vsub.f32 %v1446, %v1494
    %v1503 = vsub.f32 %v1449, %v1495
    %v1504 = vsub.f32 %v1454, %v1496
    %v1505 = vsub.f32 %v1457, %v1497
    %v1506 = vsub.f32 %v1462, %v1498
    %v1507 = vsub.f32 %v1465, %v1499
    %v1508 = vmul.f32 %v1500, %v1500
    %v1509 = vmul.f32 %v1501, %v1501
    %v1510 = vmul.f32 %v1502, %v1502
    %v1511 = vmul.f32 %v1503, %v1503
    %v1512 = vmul.f32 %v1504, %v1504
    %v1513 = vmul.f32 %v1505, %v1505
    %v1514 = vmul.f32 %v1506, %v1506
    %v1515 = vmul.f32 %v1507, %v1507
    %v1516 = vsel %vm311, %v1508, 0.0
    %1517 = vadd.xlane.f32.xlu0 %v1516
    %v1518 = vpop.xlane.xlu0 %1517
    %v1519 = vsel %vm311, %v1509, 0.0
    %1520 = vadd.xlane.f32.xlu0 %v1519
    %v1521 = vpop.xlane.xlu0 %1520
    %v1522 = vsel %vm311, %v1510, 0.0
    %1523 = vadd.xlane.f32.xlu0 %v1522
    %v1524 = vpop.xlane.xlu0 %1523
    %v1525 = vsel %vm311, %v1511, 0.0
    %1526 = vadd.xlane.f32.xlu0 %v1525
    %v1527 = vpop.xlane.xlu0 %1526
    %v1528 = vsel %vm311, %v1512, 0.0
    %1529 = vadd.xlane.f32.xlu0 %v1528
    %v1530 = vpop.xlane.xlu0 %1529
    %v1531 = vsel %vm311, %v1513, 0.0
    %1532 = vadd.xlane.f32.xlu0 %v1531
    %v1533 = vpop.xlane.xlu0 %1532
    %v1534 = vsel %vm311, %v1514, 0.0
    %1535 = vadd.xlane.f32.xlu0 %v1534
    %v1536 = vpop.xlane.xlu0 %1535
    %v1537 = vsel %vm311, %v1515, 0.0
    %1538 = vadd.xlane.f32.xlu0 %v1537
    %v1539 = vpop.xlane.xlu0 %1538
    %v1540 = vmul.f32 %v1518, %v413
    %v1541 = vmul.f32 %v1521, %v413
    %v1542 = vmul.f32 %v1524, %v413
    %v1543 = vmul.f32 %v1527, %v413
    %v1544 = vmul.f32 %v1530, %v413
    %v1545 = vmul.f32 %v1533, %v413
    %v1546 = vmul.f32 %v1536, %v413
    %v1547 = vmul.f32 %v1539, %v413
    %v1548 = vadd.f32 %v1540, 1e-05
    %v1549 = vadd.f32 %v1541, 1e-05
    %v1550 = vadd.f32 %v1542, 1e-05
    %v1551 = vadd.f32 %v1543, 1e-05
    %v1552 = vadd.f32 %v1544, 1e-05
    %v1553 = vadd.f32 %v1545, 1e-05
    %v1554 = vadd.f32 %v1546, 1e-05
    %v1555 = vadd.f32 %v1547, 1e-05
    %v1556 = vrsqrt.pop %v1548
    %v1557 = vrsqrt.pop %v1549
    %v1558 = vrsqrt.pop %v1550
    %v1559 = vrsqrt.pop %v1551
    %v1560 = vrsqrt.pop %v1552
    %v1561 = vrsqrt.pop %v1553
    %v1562 = vrsqrt.pop %v1554
    %v1563 = vrsqrt.pop %v1555
    %v1564 = vmul.f32 %v1500, %v1556
    %v1565 = vmul.f32 %v1501, %v1557
    %v1566 = vmul.f32 %v1502, %v1558
    %v1567 = vmul.f32 %v1503, %v1559
    %v1568 = vmul.f32 %v1504, %v1560
    %v1569 = vmul.f32 %v1505, %v1561
    %v1570 = vmul.f32 %v1506, %v1562
    %v1571 = vmul.f32 %v1507, %v1563
    %v1572 = vlaneseq
    %v1573 = vshrl.u32 %v1572, 7
    %v1574 = vsub.s32 6, %v1573
    %v1575 = vrot.slane %v79, %v1574
    %v1576 = vmul.f32 %v1564, %v1575
    %v1577 = vmul.f32 %v1565, %v1575
    %v1578 = vmul.f32 %v1566, %v1575
    %v1579 = vmul.f32 %v1567, %v1575
    %v1580 = vmul.f32 %v1568, %v1575
    %v1581 = vmul.f32 %v1569, %v1575
    %v1582 = vmul.f32 %v1570, %v1575
    %v1583 = vmul.f32 %v1571, %v1575
    %v1584 = vlaneseq
    %v1585 = vshrl.u32 %v1584, 7
    %v1586 = vsub.s32 7, %v1585
    %v1587 = vrot.slane %v79, %v1586
    %v1588 = vadd.f32 %v1576, %v1587
    %v1589 = vadd.f32 %v1577, %v1587
    %v1590 = vadd.f32 %v1578, %v1587
    %v1591 = vadd.f32 %v1579, %v1587
    %v1592 = vadd.f32 %v1580, %v1587
    %v1593 = vadd.f32 %v1581, %v1587
    %v1594 = vadd.f32 %v1582, %v1587
    %v1595 = vadd.f32 %v1583, %v1587
    %v1596 = vmax.f32 %v1588, 0.0
    %v1597 = vmax.f32 %v1589, 0.0
    %v1598 = vmax.f32 %v1590, 0.0
    %v1599 = vmax.f32 %v1591, 0.0
    %v1600 = vmax.f32 %v1592, 0.0
    %v1601 = vmax.f32 %v1593, 0.0
    %v1602 = vmax.f32 %v1594, 0.0
    %v1603 = vmax.f32 %v1595, 0.0
    %v1604 = vpack.c.bf16 %v1597, %v1596
    %v1605 = vpack.c.bf16 %v1599, %v1598
    %v1606 = vpack.c.bf16 %v1601, %v1600
    %v1607 = vpack.c.bf16 %v1603, %v1602
    %v1608 = vlaneseq
    %v1609 = vshrl.u32 %v1608, 7
    %v1610 = vsub.s32 0, %v1609
    %v1611 = vrot.slane %v80, %v1610
    %v1616 = vunpack.c.l.b16 %v74
    %v1617 = vunpack.c.l.b16 %v75
    %v1618 = vunpack.c.l.b16 %v76
    %v1619 = vunpack.c.l.b16 %v77
    %v1620 = vpack.c.b16 %v1617, %v1616
    %v1621 = vpack.c.b16 %v1619, %v1618
    %v1625 = vsel %vm311, %v1604, 0
    %v1628 = vsel %vm311, %v1605, 0
    %v1631 = vsel %vm311, %v1606, 0
    %v1634 = vsel %vm311, %v1607, 0
    %1636 = vmatprep.subr.bf16.mxu0 0
    %1637 = vmatpush1.bf16.msra.mxu0 %v1620
    %1638 = vmatprep.subr.bf16.mxu0 0
    %1639 = vmatpush1.bf16.msra.mxu0 %v1621
    %1640 = vmatprep.subr.bf16.mxu0 0
    %1641 = vmatpush1.bf16.msra.mxu0 0
    %1642 = vmatprep.subr.bf16.mxu0 0
    %1643 = vmatpush1.bf16.msra.mxu0 0
    %1644 = vmatprep.subr.bf16.mxu0 0
    %1645 = vmatpush1.bf16.msra.mxu0 0
    %1646 = vmatprep.subr.bf16.mxu0 0
    %1647 = vmatpush1.bf16.msra.mxu0 0
    %1648 = vmatprep.subr.bf16.mxu0 0
    %1649 = vmatpush1.bf16.msra.mxu0 0
    %1650 = vmatprep.subr.bf16.mxu0 0
    %1651 = vmatpush1.bf16.msra.mxu0 0
    %1652 = vmatprep.subr.bf16.mxu0 0
    %1653 = vmatpush1.bf16.msra.mxu0 0
    %1654 = vmatprep.subr.bf16.mxu0 0
    %1655 = vmatpush1.bf16.msra.mxu0 0
    %1656 = vmatprep.subr.bf16.mxu0 0
    %1657 = vmatpush1.bf16.msra.mxu0 0
    %1658 = vmatprep.subr.bf16.mxu0 0
    %1659 = vmatpush1.bf16.msra.mxu0 0
    %1660 = vmatprep.subr.bf16.mxu0 0
    %1661 = vmatpush1.bf16.msra.mxu0 0
    %1662 = vmatprep.subr.bf16.mxu0 0
    %1663 = vmatpush1.bf16.msra.mxu0 0
    %1664 = vmatprep.subr.bf16.mxu0 0
    %1665 = vmatpush1.bf16.msra.mxu0 0
    %1666 = vmatprep.subr.bf16.mxu0 0
    %1667 = vmatpush1.bf16.msra.mxu0 0
    %1668 = vmatprep.mubr.bf16.mxu0 0
    %1669 = vmatmul.mubr.bf16.gmra.mrb[0].mxu0 %v1625
    %v1670 = vpop.f32.mrb[0].mxu0
    %v1671 = vadd.f32 %v1611, %v1670
    %v1672 = vpop.f32.mrb[0].mxu0
    %v1673 = vpop.f32.mrb[0].mxu0
    %v1674 = vadd.f32 %v1611, %v1673
    %v1675 = vpop.f32.mrb[0].mxu0
    %1676 = vmatprep.mubr.bf16.mxu0 0
    %1677 = vmatmul.mubr.bf16.gmra.mrb[0].mxu0 %v1628
    %v1678 = vpop.f32.mrb[0].mxu0
    %v1679 = vadd.f32 %v1611, %v1678
    %v1680 = vpop.f32.mrb[0].mxu0
    %v1681 = vpop.f32.mrb[0].mxu0
    %v1682 = vadd.f32 %v1611, %v1681
    %v1683 = vpop.f32.mrb[0].mxu0
    %1684 = vmatprep.mubr.bf16.mxu0 0
    %1685 = vmatmul.mubr.bf16.gmra.mrb[0].mxu0 %v1631
    %v1686 = vpop.f32.mrb[0].mxu0
    %v1687 = vadd.f32 %v1611, %v1686
    %v1688 = vpop.f32.mrb[0].mxu0
    %v1689 = vpop.f32.mrb[0].mxu0
    %v1690 = vadd.f32 %v1611, %v1689
    %v1691 = vpop.f32.mrb[0].mxu0
    %1692 = vmatprep.mubr.bf16.mxu0 0
    %1693 = vmatmul.mubr.bf16.gmra.mrb[0].mxu0 %v1634
    %v1694 = vpop.f32.mrb[0].mxu0
    %v1695 = vadd.f32 %v1611, %v1694
    %v1696 = vpop.f32.mrb[0].mxu0
    %v1697 = vpop.f32.mrb[0].mxu0
    %v1698 = vadd.f32 %v1611, %v1697
    %v1699 = vpop.f32.mrb[0].mxu0
    %1700 = vdwg.mxu0
    %v1701 = vmul.f32 %v1671, %v1671
    %v1702 = vmul.f32 %v1674, %v1674
    %v1703 = vmul.f32 %v1679, %v1679
    %v1704 = vmul.f32 %v1682, %v1682
    %v1705 = vmul.f32 %v1687, %v1687
    %v1706 = vmul.f32 %v1690, %v1690
    %v1707 = vmul.f32 %v1695, %v1695
    %v1708 = vmul.f32 %v1698, %v1698
    %v1709 = vsel %vm311, %v1701, 0.0
    %1710 = vadd.xlane.f32.xlu0 %v1709
    %v1711 = vpop.xlane.xlu0 %1710
    %v1712 = vsel %vm311, %v1702, 0.0
    %1713 = vadd.xlane.f32.xlu0 %v1712
    %v1714 = vpop.xlane.xlu0 %1713
    %v1715 = vsel %vm311, %v1703, 0.0
    %1716 = vadd.xlane.f32.xlu0 %v1715
    %v1717 = vpop.xlane.xlu0 %1716
    %v1718 = vsel %vm311, %v1704, 0.0
    %1719 = vadd.xlane.f32.xlu0 %v1718
    %v1720 = vpop.xlane.xlu0 %1719
    %v1721 = vsel %vm311, %v1705, 0.0
    %1722 = vadd.xlane.f32.xlu0 %v1721
    %v1723 = vpop.xlane.xlu0 %1722
    %v1724 = vsel %vm311, %v1706, 0.0
    %1725 = vadd.xlane.f32.xlu0 %v1724
    %v1726 = vpop.xlane.xlu0 %1725
    %v1727 = vsel %vm311, %v1707, 0.0
    %1728 = vadd.xlane.f32.xlu0 %v1727
    %v1729 = vpop.xlane.xlu0 %1728
    %v1730 = vsel %vm311, %v1708, 0.0
    %1731 = vadd.xlane.f32.xlu0 %v1730
    %v1732 = vpop.xlane.xlu0 %1731
    %v1733 = vmax.f32 %v1711, 1e-24
    %v1734 = vmax.f32 %v1714, 1e-24
    %v1735 = vmax.f32 %v1717, 1e-24
    %v1736 = vmax.f32 %v1720, 1e-24
    %v1737 = vmax.f32 %v1723, 1e-24
    %v1738 = vmax.f32 %v1726, 1e-24
    %v1739 = vmax.f32 %v1729, 1e-24
    %v1740 = vmax.f32 %v1732, 1e-24
    %v1741 = vrsqrt.pop %v1733
    %v1742 = vrsqrt.pop %v1734
    %v1743 = vrsqrt.pop %v1735
    %v1744 = vrsqrt.pop %v1736
    %v1745 = vrsqrt.pop %v1737
    %v1746 = vrsqrt.pop %v1738
    %v1747 = vrsqrt.pop %v1739
    %v1748 = vrsqrt.pop %v1740
    %v1749 = vmul.f32 %v22, %v22
    %v1750 = vmul.f32 %v23, %v23
    %v1751 = vmul.f32 %v24, %v24
    %v1752 = vmul.f32 %v25, %v25
    %v1753 = vmul.f32 %v26, %v26
    %v1754 = vmul.f32 %v27, %v27
    %v1755 = vmul.f32 %v28, %v28
    %v1756 = vmul.f32 %v29, %v29
    %v1757 = vsel %vm311, %v1749, 0.0
    %1758 = vadd.xlane.f32.xlu0 %v1757
    %v1759 = vpop.xlane.xlu0 %1758
    %v1760 = vsel %vm311, %v1750, 0.0
    %1761 = vadd.xlane.f32.xlu0 %v1760
    %v1762 = vpop.xlane.xlu0 %1761
    %v1763 = vsel %vm311, %v1751, 0.0
    %1764 = vadd.xlane.f32.xlu0 %v1763
    %v1765 = vpop.xlane.xlu0 %1764
    %v1766 = vsel %vm311, %v1752, 0.0
    %1767 = vadd.xlane.f32.xlu0 %v1766
    %v1768 = vpop.xlane.xlu0 %1767
    %v1769 = vsel %vm311, %v1753, 0.0
    %1770 = vadd.xlane.f32.xlu0 %v1769
    %v1771 = vpop.xlane.xlu0 %1770
    %v1772 = vsel %vm311, %v1754, 0.0
    %1773 = vadd.xlane.f32.xlu0 %v1772
    %v1774 = vpop.xlane.xlu0 %1773
    %v1775 = vsel %vm311, %v1755, 0.0
    %1776 = vadd.xlane.f32.xlu0 %v1775
    %v1777 = vpop.xlane.xlu0 %1776
    %v1778 = vsel %vm311, %v1756, 0.0
    %1779 = vadd.xlane.f32.xlu0 %v1778
    %v1780 = vpop.xlane.xlu0 %1779
    %v1781 = vmax.f32 %v1759, 1e-24
    %v1782 = vmax.f32 %v1762, 1e-24
    %v1783 = vmax.f32 %v1765, 1e-24
    %v1784 = vmax.f32 %v1768, 1e-24
    %v1785 = vmax.f32 %v1771, 1e-24
    %v1786 = vmax.f32 %v1774, 1e-24
    %v1787 = vmax.f32 %v1777, 1e-24
    %v1788 = vmax.f32 %v1780, 1e-24
    %v1789 = vrsqrt.pop %v1781
    %v1790 = vrsqrt.pop %v1782
    %v1791 = vrsqrt.pop %v1783
    %v1792 = vrsqrt.pop %v1784
    %v1793 = vrsqrt.pop %v1785
    %v1794 = vrsqrt.pop %v1786
    %v1795 = vrsqrt.pop %v1787
    %v1796 = vrsqrt.pop %v1788
    %v1797 = vmul.f32 %v1671, %v22
    %v1798 = vmul.f32 %v1674, %v23
    %v1799 = vmul.f32 %v1679, %v24
    %v1800 = vmul.f32 %v1682, %v25
    %v1801 = vmul.f32 %v1687, %v26
    %v1802 = vmul.f32 %v1690, %v27
    %v1803 = vmul.f32 %v1695, %v28
    %v1804 = vmul.f32 %v1698, %v29
    %v1805 = vsel %vm311, %v1797, 0.0
    %1806 = vadd.xlane.f32.xlu0 %v1805
    %v1807 = vpop.xlane.xlu0 %1806
    %v1808 = vsel %vm311, %v1798, 0.0
    %1809 = vadd.xlane.f32.xlu0 %v1808
    %v1810 = vpop.xlane.xlu0 %1809
    %v1811 = vsel %vm311, %v1799, 0.0
    %1812 = vadd.xlane.f32.xlu0 %v1811
    %v1813 = vpop.xlane.xlu0 %1812
    %v1814 = vsel %vm311, %v1800, 0.0
    %1815 = vadd.xlane.f32.xlu0 %v1814
    %v1816 = vpop.xlane.xlu0 %1815
    %v1817 = vsel %vm311, %v1801, 0.0
    %1818 = vadd.xlane.f32.xlu0 %v1817
    %v1819 = vpop.xlane.xlu0 %1818
    %v1820 = vsel %vm311, %v1802, 0.0
    %1821 = vadd.xlane.f32.xlu0 %v1820
    %v1822 = vpop.xlane.xlu0 %1821
    %v1823 = vsel %vm311, %v1803, 0.0
    %1824 = vadd.xlane.f32.xlu0 %v1823
    %v1825 = vpop.xlane.xlu0 %1824
    %v1826 = vsel %vm311, %v1804, 0.0
    %1827 = vadd.xlane.f32.xlu0 %v1826
    %v1828 = vpop.xlane.xlu0 %1827
    %v1829 = vmul.f32 %v1807, %v1741
    %v1830 = vmul.f32 %v1810, %v1742
    %v1831 = vmul.f32 %v1813, %v1743
    %v1832 = vmul.f32 %v1816, %v1744
    %v1833 = vmul.f32 %v1819, %v1745
    %v1834 = vmul.f32 %v1822, %v1746
    %v1835 = vmul.f32 %v1825, %v1747
    %v1836 = vmul.f32 %v1828, %v1748
    %v1837 = vmul.f32 %v1829, %v1789
    %v1838 = vmul.f32 %v1830, %v1790
    %v1839 = vmul.f32 %v1831, %v1791
    %v1840 = vmul.f32 %v1832, %v1792
    %v1841 = vmul.f32 %v1833, %v1793
    %v1842 = vmul.f32 %v1834, %v1794
    %v1843 = vmul.f32 %v1835, %v1795
    %v1844 = vmul.f32 %v1836, %v1796
    %v1845 = vsub.f32 1.0, %v1837
    %v1846 = vsub.f32 1.0, %v1838
    %v1847 = vsub.f32 1.0, %v1839
    %v1848 = vsub.f32 1.0, %v1840
    %v1849 = vsub.f32 1.0, %v1841
    %v1850 = vsub.f32 1.0, %v1842
    %v1851 = vsub.f32 1.0, %v1843
    %v1852 = vsub.f32 1.0, %v1844
    %v1853 = vmul.f32 %v1845, %v1845
    %v1854 = vmul.f32 %v1846, %v1846
    %v1855 = vmul.f32 %v1847, %v1847
    %v1856 = vmul.f32 %v1848, %v1848
    %v1857 = vmul.f32 %v1849, %v1849
    %v1858 = vmul.f32 %v1850, %v1850
    %v1859 = vmul.f32 %v1851, %v1851
    %v1860 = vmul.f32 %v1852, %v1852
    %v1861 = vmul.f32 %v1853, %v1845
    %v1862 = vmul.f32 %v1854, %v1846
    %v1863 = vmul.f32 %v1855, %v1847
    %v1864 = vmul.f32 %v1856, %v1848
    %v1865 = vmul.f32 %v1857, %v1849
    %v1866 = vmul.f32 %v1858, %v1850
    %v1867 = vmul.f32 %v1859, %v1851
    %v1868 = vmul.f32 %v1860, %v1852
    %v1869 = vmul.f32 %v1861, %v38
    %v1870 = vmul.f32 %v1862, %v39
    %v1871 = vmul.f32 %v1863, %v40
    %v1872 = vmul.f32 %v1864, %v41
    %v1873 = vmul.f32 %v1865, %v42
    %v1874 = vmul.f32 %v1866, %v43
    %v1875 = vmul.f32 %v1867, %v44
    %v1876 = vmul.f32 %v1868, %v45
    %vm1877 = vcmask 7168
    %v1878 = vsel %vm1877, %v1869, 0.0
    %v1879 = vsel %vm1877, %v1870, 0.0
    %v1880 = vadd.f32 %v1878, %v1879
    %v1881 = vsel %vm1877, %v1871, 0.0
    %v1882 = vadd.f32 %v1880, %v1881
    %v1883 = vsel %vm1877, %v1872, 0.0
    %v1884 = vadd.f32 %v1882, %v1883
    %v1885 = vsel %vm1877, %v1873, 0.0
    %v1886 = vadd.f32 %v1884, %v1885
    %v1887 = vsel %vm1877, %v1874, 0.0
    %v1888 = vadd.f32 %v1886, %v1887
    %v1889 = vsel %vm1877, %v1875, 0.0
    %v1890 = vadd.f32 %v1888, %v1889
    %v1891 = vsel %vm1877, %v1876, 0.0
    %v1892 = vadd.f32 %v1890, %v1891
    %v1893 = vrot.slane %v1892, 4
    %v1894 = vadd.f32 %v1892, %v1893
    %v1895 = vrot.slane %v1894, 2
    %v1896 = vadd.f32 %v1894, %v1895
    %v1897 = vrot.slane %v1896, 1
    %v1898 = vadd.f32 %v1896, %v1897
    %v1899 = vmul.f32 %v1898, 0.03125
    %vm1900 = vcmask 0
    %1901 = vst.msk [vmem:[#allocation2] sm:$0x1] %vm1900, %v1899
    // Predicated region
    $region22: #{graphmae_forward.1} parent=1 // pred_check
      _
    $region23: #{graphmae_forward.1} parent=1 // pred_check_branch
      %1903 = sbr.rel (0) target = $region25
    $region24: #{graphmae_forward.1} parent=1 // pred_region
      %s1905 = ssub.s32 16, 16
      %1906 = vsyncadd [#allocation3], %s1905
      %s1908 = sshll.u32 [#allocation2], 4
      %s1909 = int_to_ptr.vmem [resolvable:$true] %s1908
      %1911 = dma.vmem_to_hbm [thread:$0]  %s1909, 16, %s5, [#allocation3]
    $region25: #{graphmae_forward.1} parent=1 // pred_fallthru
      _
    // Predicated region
    $region26: #{graphmae_forward.1} parent=1 // pred_check
      _
    $region27: #{graphmae_forward.1} parent=1 // pred_check_branch
      %1913 = sbr.rel (0) target = $region29
    $region28: #{graphmae_forward.1} parent=1 // pred_region
      %1914 = dma.done [#allocation3], 16
    $region29: #{graphmae_forward.1} parent=1 // pred_fallthru
      _
    %1915 = vsyncpa [#allocation3], 1

</llo_original>
